<compile_context>
chip_gen: v6e
topology: v6e:2x2x1
jax: 0.10.0
libtpu: 0.0.40
codegen_flags: <defaults>
</compile_context>

<pallas_src>
import functools

import jax
import jax.numpy as jnp
import numpy as np
from jax.experimental import pallas as pl
from jax.experimental.pallas import tpu as pltpu

LN_EPS = 1e-5  # torch.nn.LayerNorm default eps
_SQRT2 = 1.4142135623730951


def _gelu_exact(x):
    # torch.nn.GELU() default (approximate='none'): 0.5*x*(1+erf(x/sqrt(2)))
    return 0.5 * x * (1.0 + jax.lax.erf(x / _SQRT2))


# ----------------------------- sizing helpers -----------------------------

def _vmem_sizes():
    """Generation-aware (budget, vmem_limit) in bytes."""
    cap = 64 * 1024 * 1024  # conservative fallback = v7x physical VMEM
    try:
        info = pltpu.get_tpu_info()
        cap = int(getattr(info, "vmem_capacity_bytes", cap))
    except Exception:
        pass
    return int(cap * 0.55), int(cap * 0.70)


def _largest_divisor_leq(total, cap):
    cap = int(max(1, min(total, cap)))
    for t in range(cap, 0, -1):
        if total % t == 0:
            return t
    return total


def _divisor_multiple_leq(total, mult, cap):
    """Largest d <= cap with d | total and d % mult == 0; else the full extent."""
    cap = int(max(1, min(total, cap)))
    for d in range(cap, 0, -1):
        if total % d == 0 and d % mult == 0:
            return d
    return total  # full extent is always layout-legal


def _pick_window_tile(Bn, N, C, hd, itemsize, budget):
    # per-head bf16 q/k/v/proj weight slices, double-buffered
    weights = 2 * 2 * 2 * 4 * C * hd
    # per-window working set: xn(bf16) + acc(f32) + in/out blocks (double-buffered)
    # + q/k/v, scores, probs, per-head output in f32
    per_w = N * C * (2 + 4 + 2 * 2 * itemsize) + 4 * (3 * N * hd + 2 * N * N + N * C)
    rem = budget - weights - (1 << 20)
    cap = max(1, rem // max(per_w, 1))
    if Bn >= 2:
        cap = min(cap, max(1, Bn // 2))   # >=2 steps on the parallel axis (v7x)
    cap = min(cap, 64)
    return _largest_divisor_leq(Bn, cap)


def _pick_mlp_tiles(R, C, M, itemsize, budget):
    r_cap = min(512, R // 2) if R >= 16 else R
    tile_r = _divisor_multiple_leq(R, 8, max(8, r_cap))
    # scratches (x f32 + acc f32 + xn bf16) + double-buffered row i/o blocks
    fixed = tile_r * C * (4 + 4 + 2) + 3 * 2 * tile_r * C * itemsize
    # per unit of tile_m: w1+w2 bf16 slices (double-buffered) + b1 + hidden act (f32)
    per_m = 2 * 2 * 2 * C + 4 * tile_r + 8
    rem = budget - fixed - (1 << 20)
    m_cap = max(128, rem // max(per_m, 1))
    if M % 128 == 0 and M > 128:
        tile_m = _divisor_multiple_leq(M, 128, min(m_cap, M))
    else:
        tile_m = M
    return tile_r, tile_m


# ----------------------------- Pallas kernels -----------------------------

def _ln_kernel(x_ref, g_ref, b_ref, o_ref):
    x = x_ref[...].astype(jnp.float32)
    mu = jnp.mean(x, axis=-1, keepdims=True)
    var = jnp.mean(jnp.square(x - mu), axis=-1, keepdims=True)
    y = (x - mu) * jax.lax.rsqrt(var + LN_EPS)
    o_ref[...] = (y * g_ref[...] + b_ref[...]).astype(o_ref.dtype)


def layer_norm(x2d, gamma, beta):
    """Row-tiled LayerNorm (only used on the padded-window fallback path)."""
    R, C = x2d.shape
    _, limit = _vmem_sizes()
    tile_r = _divisor_multiple_leq(R, 8, 512)
    return pl.pallas_call(
        _ln_kernel,
        out_shape=jax.ShapeDtypeStruct((R, C), x2d.dtype),
        grid=(R // tile_r,),
        in_specs=[
            pl.BlockSpec((tile_r, C), lambda i: (i, 0)),
            pl.BlockSpec((1, C), lambda i: (0, 0)),
            pl.BlockSpec((1, C), lambda i: (0, 0)),
        ],
        out_specs=pl.BlockSpec((tile_r, C), lambda i: (i, 0)),
        compiler_params=pltpu.CompilerParams(
            dimension_semantics=("parallel",), vmem_limit_bytes=limit),
    )(x2d, gamma.reshape(1, C), beta.reshape(1, C))


def _attn_kernel(x_ref, g_ref, b_ref, wq_ref, wk_ref, wv_ref,
                 bq_ref, bk_ref, bv_ref, wp_ref, bp_ref,
                 o_ref, xn_scr, acc_scr, *, apply_ln):
    h = pl.program_id(1)
    nh = pl.num_programs(1)
    WB, N, C = x_ref.shape
    hd = wq_ref.shape[-1]

    # LN1 (or plain cast on the padded fallback path) — once per window block.
    @pl.when(h == 0)
    def _():
        x = x_ref[...].reshape(WB * N, C).astype(jnp.float32)
        if apply_ln:
            mu = jnp.mean(x, axis=-1, keepdims=True)
            var = jnp.mean(jnp.square(x - mu), axis=-1, keepdims=True)
            x = (x - mu) * jax.lax.rsqrt(var + LN_EPS) * g_ref[...] + b_ref[...]
        xn_scr[...] = x.astype(jnp.bfloat16)

    xn = xn_scr[...]                                              # (WB*N, C) bf16

    # per-head projections (scale already folded into wq/bq by the wrapper)
    q = (jnp.dot(xn, wq_ref[0], preferred_element_type=jnp.float32)
         + bq_ref[0]).astype(jnp.bfloat16).reshape(WB, N, hd)
    k = (jnp.dot(xn, wk_ref[0], preferred_element_type=jnp.float32)
         + bk_ref[0]).astype(jnp.bfloat16).reshape(WB, N, hd)
    v = (jnp.dot(xn, wv_ref[0], preferred_element_type=jnp.float32)
         + bv_ref[0]).astype(jnp.bfloat16).reshape(WB, N, hd)

    # window-batched attention, f32 softmax statistics
    s = jnp.einsum('wqd,wkd->wqk', q, k, preferred_element_type=jnp.float32)
    s = s - jnp.max(s, axis=-1, keepdims=True)
    p = jnp.exp(s)
    p = p * pl.reciprocal(jnp.sum(p, axis=-1, keepdims=True), approx=True)

    oh = jnp.einsum('wqk,wkd->wqd', p.astype(jnp.bfloat16), v,
                    preferred_element_type=jnp.float32)           # (WB, N, hd)

    # per-head output projection, accumulated across the head grid axis
    contrib = jnp.dot(oh.reshape(WB * N, hd).astype(jnp.bfloat16), wp_ref[0],
                      preferred_element_type=jnp.float32)         # (WB*N, C)

    @pl.when(h == 0)
    def _():
        acc_scr[...] = contrib

    @pl.when(h > 0)
    def _():
        acc_scr[...] += contrib

    @pl.when(h == nh - 1)
    def _():
        o_ref[...] = (acc_scr[...] + bp_ref[...]).reshape(WB, N, C).astype(o_ref.dtype)


def attention(tokens, ln_g, ln_b, wq, wk, wv, bq, bk, bv, wp, bp, apply_ln):
    # tokens: (Bn, N, C); weights pre-split per head: wq/wk/wv (nh, C, hd), wp (nh, hd, C)
    Bn, N, C = tokens.shape
    nh, _, hd = wq.shape
    budget, limit = _vmem_sizes()
    WB = _pick_window_tile(Bn, N, C, hd, tokens.dtype.itemsize, budget)
    kernel = functools.partial(_attn_kernel, apply_ln=apply_ln)
    return pl.pallas_call(
        kernel,
        out_shape=jax.ShapeDtypeStruct((Bn, N, C), tokens.dtype),
        grid=(Bn // WB, nh),
        in_specs=[
            pl.BlockSpec((WB, N, C), lambda b, h: (b, 0, 0)),
            pl.BlockSpec((1, C), lambda b, h: (0, 0)),
            pl.BlockSpec((1, C), lambda b, h: (0, 0)),
            pl.BlockSpec((1, C, hd), lambda b, h: (h, 0, 0)),
            pl.BlockSpec((1, C, hd), lambda b, h: (h, 0, 0)),
            pl.BlockSpec((1, C, hd), lambda b, h: (h, 0, 0)),
            pl.BlockSpec((1, 1, hd), lambda b, h: (h, 0, 0)),
            pl.BlockSpec((1, 1, hd), lambda b, h: (h, 0, 0)),
            pl.BlockSpec((1, 1, hd), lambda b, h: (h, 0, 0)),
            pl.BlockSpec((1, hd, C), lambda b, h: (h, 0, 0)),
            pl.BlockSpec((1, C), lambda b, h: (0, 0)),
        ],
        out_specs=pl.BlockSpec((WB, N, C), lambda b, h: (b, 0, 0)),
        scratch_shapes=[pltpu.VMEM((WB * N, C), jnp.bfloat16),
                        pltpu.VMEM((WB * N, C), jnp.float32)],
        compiler_params=pltpu.CompilerParams(
            dimension_semantics=("parallel", "arbitrary"),
            vmem_limit_bytes=limit),
    )(tokens, ln_g.reshape(1, C), ln_b.reshape(1, C),
      wq, wk, wv, bq, bk, bv, wp, bp.reshape(1, C))


def _mlp_kernel(s_ref, a_ref, g_ref, b_ref, w1_ref, b1_ref, w2_ref, b2_ref,
                o_ref, x_scr, xn_scr, acc_scr):
    m = pl.program_id(1)
    nm = pl.num_programs(1)

    # residual-1 + LN2, computed once per row tile (at m == 0), reused across m
    @pl.when(m == 0)
    def _():
        x = s_ref[...].astype(jnp.float32) + a_ref[...].astype(jnp.float32)
        mu = jnp.mean(x, axis=-1, keepdims=True)
        var = jnp.mean(jnp.square(x - mu), axis=-1, keepdims=True)
        xn = (x - mu) * jax.lax.rsqrt(var + LN_EPS) * g_ref[...] + b_ref[...]
        x_scr[...] = x
        xn_scr[...] = xn.astype(jnp.bfloat16)

    h = jnp.dot(xn_scr[...], w1_ref[...],
                preferred_element_type=jnp.float32) + b1_ref[...]
    h = _gelu_exact(h)
    contrib = jnp.dot(h.astype(jnp.bfloat16), w2_ref[...],
                      preferred_element_type=jnp.float32)

    @pl.when(m == 0)
    def _():
        acc_scr[...] = contrib

    @pl.when(m > 0)
    def _():
        acc_scr[...] += contrib

    @pl.when(m == nm - 1)
    def _():
        o_ref[...] = (x_scr[...] + acc_scr[...] + b2_ref[...]).astype(o_ref.dtype)


def mlp_block(shortcut2d, attn2d, gamma, beta, w1, b1, w2, b2):
    R, C = shortcut2d.shape
    M = w1.shape[1]
    budget, limit = _vmem_sizes()
    tile_r, tile_m = _pick_mlp_tiles(R, C, M, shortcut2d.dtype.itemsize, budget)
    w1b = w1.astype(jnp.bfloat16)
    w2b = w2.astype(jnp.bfloat16)
    return pl.pallas_call(
        _mlp_kernel,
        out_shape=jax.ShapeDtypeStruct((R, C), shortcut2d.dtype),
        grid=(R // tile_r, M // tile_m),
        in_specs=[
            pl.BlockSpec((tile_r, C), lambda i, m: (i, 0)),
            pl.BlockSpec((tile_r, C), lambda i, m: (i, 0)),
            pl.BlockSpec((1, C), lambda i, m: (0, 0)),
            pl.BlockSpec((1, C), lambda i, m: (0, 0)),
            pl.BlockSpec((C, tile_m), lambda i, m: (0, m)),
            pl.BlockSpec((1, tile_m), lambda i, m: (0, m)),
            pl.BlockSpec((tile_m, C), lambda i, m: (m, 0)),
            pl.BlockSpec((1, C), lambda i, m: (0, 0)),
        ],
        out_specs=pl.BlockSpec((tile_r, C), lambda i, m: (i, 0)),
        scratch_shapes=[pltpu.VMEM((tile_r, C), jnp.float32),
                        pltpu.VMEM((tile_r, C), jnp.bfloat16),
                        pltpu.VMEM((tile_r, C), jnp.float32)],
        compiler_params=pltpu.CompilerParams(
            dimension_semantics=("parallel", "arbitrary"),
            vmem_limit_bytes=limit),
    )(shortcut2d, attn2d, gamma.reshape(1, C), beta.reshape(1, C),
      w1b, b1.reshape(1, M), w2b, b2.reshape(1, C))


# ----------------------------- glue (pure JAX) -----------------------------

def window_partition_jax(x, window_size):
    B, H, W, C = x.shape
    pad_h = (window_size - H % window_size) % window_size
    pad_w = (window_size - W % window_size) % window_size
    if pad_h > 0 or pad_w > 0:
        x = jnp.pad(x, ((0, 0), (0, pad_h), (0, pad_w), (0, 0)))
    Hp, Wp = H + pad_h, W + pad_w
    x = x.reshape(B, Hp // window_size, window_size, Wp // window_size, window_size, C)
    windows = x.transpose(0, 1, 3, 2, 4, 5).reshape(-1, window_size, window_size, C)
    return windows, (Hp, Wp)


def window_unpartition_jax(windows, window_size, pad_hw, hw):
    Hp, Wp = pad_hw
    H, W = hw
    B = windows.shape[0] // (Hp * Wp // window_size // window_size)
    x = windows.reshape(B, Hp // window_size, Wp // window_size,
                        window_size, window_size, -1)
    x = x.transpose(0, 1, 3, 2, 4, 5).reshape(B, Hp, Wp, -1)
    return x[:, :H, :W, :]


def block_forward(x, params, num_heads, window_size):
    """Pallas-backed forward of the Block module."""
    B, H, W, C = x.shape
    shortcut = x
    hd = C // num_heads
    scale = float(hd) ** -0.5

    # split qkv/proj weights per head; fold the attention scale into q; bf16 MXU operands
    wqkv = params["wqkv"]
    bqkv = params["bqkv"]
    wq = (wqkv[:, :C] * scale).reshape(C, num_heads, hd).transpose(1, 0, 2)
    wk = wqkv[:, C:2 * C].reshape(C, num_heads, hd).transpose(1, 0, 2)
    wv = wqkv[:, 2 * C:].reshape(C, num_heads, hd).transpose(1, 0, 2)
    bq = (bqkv[:C] * scale).reshape(num_heads, 1, hd)
    bk = bqkv[C:2 * C].reshape(num_heads, 1, hd)
    bv = bqkv[2 * C:].reshape(num_heads, 1, hd)
    wp = params["wproj"].reshape(num_heads, hd, C)
    wq, wk, wv, wp = (w.astype(jnp.bfloat16) for w in (wq, wk, wv, wp))

    if window_size > 0:
        ws = window_size
        pad_h = (ws - H % ws) % ws
        pad_w = (ws - W % ws) % ws
        if pad_h > 0 or pad_w > 0:
            # padded-window fallback: LN must run before zero-padding to match
            # the reference exactly, so use the standalone row-tiled LN kernel.
            xn = layer_norm(x.reshape(-1, C), params["ln1_g"],
                            params["ln1_b"]).reshape(B, H, W, C)
            xw, pad_hw = window_partition_jax(xn, ws)
            apply_ln = False
        else:
            # common case: LN1 fused into the attention kernel
            xw, pad_hw = window_partition_jax(x, ws)
            apply_ln = True
        tokens = xw.reshape(-1, ws * ws, C)
    else:
        tokens = x.reshape(B, H * W, C)
        apply_ln = True

    attn_out = attention(tokens, params["ln1_g"], params["ln1_b"],
                         wq, wk, wv, bq, bk, bv, wp, params["bproj"], apply_ln)

    if window_size > 0:
        attn_out = attn_out.reshape(-1, ws, ws, C)
        attn_out = window_unpartition_jax(attn_out, ws, pad_hw, (H, W))
    else:
        attn_out = attn_out.reshape(B, H, W, C)

    # residual 1, LN2, MLP (hidden-dim-tiled), residual 2 — one fused kernel
    y = mlp_block(shortcut.reshape(-1, C), attn_out.reshape(-1, C),
                  params["ln2_g"], params["ln2_b"],
                  params["w1"], params["b1"], params["w2"], params["b2"])
    return y.reshape(B, H, W, C)


# ----------------------------- pure-JAX reference -----------------------------

def _ln_ref(x, g, b):
    mu = jnp.mean(x, axis=-1, keepdims=True)
    var = jnp.mean(jnp.square(x - mu), axis=-1, keepdims=True)
    return (x - mu) * jax.lax.rsqrt(var + LN_EPS) * g + b


def _attn_ref(x, wqkv, bqkv, wproj, bproj, num_heads):
    Bn, h_, w_, C = x.shape
    N = h_ * w_
    hd = C // num_heads
    scale = float(hd) ** -0.5
    qkv = x.reshape(Bn, N, C) @ wqkv + bqkv
    qkv = qkv.reshape(Bn, N, 3, num_heads, hd).transpose(2, 0, 3, 1, 4)
    q, k, v = qkv[0], qkv[1], qkv[2]                       # (Bn, nh, N, hd)
    attn = (q * scale) @ jnp.swapaxes(k, -2, -1)
    attn = jax.nn.softmax(attn, axis=-1)
    out = attn @ v
    out = out.transpose(0, 2, 1, 3).reshape(Bn, N, C)
    out = out @ wproj + bproj
    return out.reshape(Bn, h_, w_, C)


def block_reference(x, params, num_heads, window_size):
    B, H, W, C = x.shape
    shortcut = x
    xn = _ln_ref(x, params["ln1_g"], params["ln1_b"])
    if window_size > 0:
        xw, pad_hw = window_partition_jax(xn, window_size)
    else:
        xw = xn
    a = _attn_ref(xw, params["wqkv"], params["bqkv"], params["wproj"],
                  params["bproj"], num_heads)
    if window_size > 0:
        a = window_unpartition_jax(a, window_size, pad_hw, (H, W))
    x = shortcut + a
    xn2 = _ln_ref(x, params["ln2_g"], params["ln2_b"])
    h = _gelu_exact(xn2 @ params["w1"] + params["b1"])
    y = h @ params["w2"] + params["b2"]
    return x + y


# ----------------------------- main -----------------------------

if __name__ == "__main__":
    B, H, W = 2, 8, 8
    dim, num_heads = 32, 4
    mlp_ratio = 4.0
    window_size = 4          # window attention path; 0 => global attention
    mlp_dim = int(dim * mlp_ratio)

    key = jax.random.PRNGKey(0)
    keys = jax.random.split(key, 13)

    def nrm(k, shape, s=0.1):
        return (s * jax.random.normal(k, shape)).astype(jnp.float32)

    params = {
        "ln1_g": jnp.ones((dim,), jnp.float32) + nrm(keys[0], (dim,), 0.02),
        "ln1_b": nrm(keys[1], (dim,), 0.02),
        "wqkv": nrm(keys[2], (dim, 3 * dim)),    # transposed nn.Linear weight
        "bqkv": nrm(keys[3], (3 * dim,), 0.02),
        "wproj": nrm(keys[4], (dim, dim)),
        "bproj": nrm(keys[5], (dim,), 0.02),
        "ln2_g": jnp.ones((dim,), jnp.float32) + nrm(keys[6], (dim,), 0.02),
        "ln2_b": nrm(keys[7], (dim,), 0.02),
        "w1": nrm(keys[8], (dim, mlp_dim)),
        "b1": nrm(keys[9], (mlp_dim,), 0.02),
        "w2": nrm(keys[10], (mlp_dim, dim)),
        "b2": nrm(keys[11], (dim,), 0.02),
    }

    x = jax.random.normal(keys[12], (B, H, W, dim), jnp.float32)

    out = block_forward(x, params, num_heads, window_size)
    out = jax.block_until_ready(out)

    ref = block_reference(x, params, num_heads, window_size)
    assert out.shape == (B, H, W, dim)
    # bf16 MXU operands + approx-reciprocal softmax => slightly looser tolerance
    np.testing.assert_allclose(np.asarray(out), np.asarray(ref),
                               atol=2e-2, rtol=2e-2)
    print("KERNEL_OK")
</pallas_src>

<mosaic_0001>
module attributes {stable_mosaic.version = 11 : i64} {
  func.func @_attn_kernel(%arg0: i32, %arg1: i32, %arg2: memref<4x16x32xf32, #tpu.memory_space<vmem>>, %arg3: memref<1x32xf32, #tpu.memory_space<vmem>>, %arg4: memref<1x32xf32, #tpu.memory_space<vmem>>, %arg5: memref<1x32x8xbf16, #tpu.memory_space<vmem>>, %arg6: memref<1x32x8xbf16, #tpu.memory_space<vmem>>, %arg7: memref<1x32x8xbf16, #tpu.memory_space<vmem>>, %arg8: memref<1x1x8xf32, #tpu.memory_space<vmem>>, %arg9: memref<1x1x8xf32, #tpu.memory_space<vmem>>, %arg10: memref<1x1x8xf32, #tpu.memory_space<vmem>>, %arg11: memref<1x8x32xbf16, #tpu.memory_space<vmem>>, %arg12: memref<1x32xf32, #tpu.memory_space<vmem>>, %arg13: memref<4x16x32xf32, #tpu.memory_space<vmem>>, %arg14: memref<64x32xbf16, #tpu.memory_space<vmem>>, %arg15: memref<64x32xf32, #tpu.memory_space<vmem>>) attributes {dimension_semantics = [#tpu.dimension_semantics<parallel>, #tpu.dimension_semantics<arbitrary>], iteration_bounds = array<i64: 2, 4>, scalar_prefetch = 0 : i64, scratch_operands = 2 : i64, tpu.core_type = #tpu.core_type<tc>, window_params = [{transform_indices = @transform_0, window_bounds = array<i64: 4, 16, 32>}, {pipeline_mode = #tpu.pipeline_mode<synchronous>, transform_indices = @transform_1, window_bounds = array<i64: 1, 32>}, {pipeline_mode = #tpu.pipeline_mode<synchronous>, transform_indices = @transform_2, window_bounds = array<i64: 1, 32>}, {transform_indices = @transform_3, window_bounds = array<i64: 1, 32, 8>}, {transform_indices = @transform_4, window_bounds = array<i64: 1, 32, 8>}, {transform_indices = @transform_5, window_bounds = array<i64: 1, 32, 8>}, {transform_indices = @transform_6, window_bounds = array<i64: 1, 1, 8>}, {transform_indices = @transform_7, window_bounds = array<i64: 1, 1, 8>}, {transform_indices = @transform_8, window_bounds = array<i64: 1, 1, 8>}, {transform_indices = @transform_9, window_bounds = array<i64: 1, 8, 32>}, {pipeline_mode = #tpu.pipeline_mode<synchronous>, transform_indices = @transform_10, window_bounds = array<i64: 1, 32>}, {transform_indices = @transform_11, window_bounds = array<i64: 4, 16, 32>}]} {
    %c0_i32 = arith.constant 0 : i32
    %0 = arith.cmpi eq, %arg1, %c0_i32 : i32
    %1 = arith.extui %0 : i1 to i32
    %c0_i32_0 = arith.constant 0 : i32
    %2 = arith.cmpi ne, %1, %c0_i32_0 : i32
    scf.if %2 {
      %c0_35 = arith.constant 0 : index
      %c0_36 = arith.constant 0 : index
      %c0_37 = arith.constant 0 : index
      %58 = vector.load %arg2[%c0_35, %c0_36, %c0_37] : memref<4x16x32xf32, #tpu.memory_space<vmem>>, vector<4x16x32xf32>
      %59 = vector.shape_cast %58 : vector<4x16x32xf32> to vector<64x32xf32>
      %cst_38 = arith.constant dense<0.000000e+00> : vector<64xf32>
      %60 = vector.multi_reduction <add>, %59, %cst_38 [1] : vector<64x32xf32> to vector<64xf32>
      %61 = vector.shape_cast %60 : vector<64xf32> to vector<64x1xf32>
      %cst_39 = arith.constant 3.200000e+01 : f32
      %62 = vector.broadcast %cst_39 : f32 to vector<64x1xf32>
      %63 = arith.divf %61, %62 : vector<64x1xf32>
      %64 = vector.broadcast %63 : vector<64x1xf32> to vector<64x32xf32>
      %65 = arith.subf %59, %64 : vector<64x32xf32>
      %66 = arith.mulf %65, %65 : vector<64x32xf32>
      %cst_40 = arith.constant dense<0.000000e+00> : vector<64xf32>
      %67 = vector.multi_reduction <add>, %66, %cst_40 [1] : vector<64x32xf32> to vector<64xf32>
      %68 = vector.shape_cast %67 : vector<64xf32> to vector<64x1xf32>
      %cst_41 = arith.constant 3.200000e+01 : f32
      %69 = vector.broadcast %cst_41 : f32 to vector<64x1xf32>
      %70 = arith.divf %68, %69 : vector<64x1xf32>
      %71 = vector.broadcast %63 : vector<64x1xf32> to vector<64x32xf32>
      %72 = arith.subf %59, %71 : vector<64x32xf32>
      %cst_42 = arith.constant 9.99999974E-6 : f32
      %73 = vector.broadcast %cst_42 : f32 to vector<64x1xf32>
      %74 = arith.addf %70, %73 : vector<64x1xf32>
      %75 = math.rsqrt %74 : vector<64x1xf32>
      %76 = vector.broadcast %75 : vector<64x1xf32> to vector<64x32xf32>
      %77 = arith.mulf %72, %76 : vector<64x32xf32>
      %c0_43 = arith.constant 0 : index
      %c0_44 = arith.constant 0 : index
      %78 = vector.load %arg3[%c0_43, %c0_44] : memref<1x32xf32, #tpu.memory_space<vmem>>, vector<1x32xf32>
      %79 = vector.broadcast %78 : vector<1x32xf32> to vector<64x32xf32>
      %80 = arith.mulf %77, %79 : vector<64x32xf32>
      %c0_45 = arith.constant 0 : index
      %c0_46 = arith.constant 0 : index
      %81 = vector.load %arg4[%c0_45, %c0_46] : memref<1x32xf32, #tpu.memory_space<vmem>>, vector<1x32xf32>
      %82 = vector.broadcast %81 : vector<1x32xf32> to vector<64x32xf32>
      %83 = arith.addf %80, %82 : vector<64x32xf32>
      %84 = arith.truncf %83 : vector<64x32xf32> to vector<64x32xbf16>
      %c0_47 = arith.constant 0 : index
      %c0_48 = arith.constant 0 : index
      %85 = vector.load %arg14[%c0_47, %c0_48] : memref<64x32xbf16, #tpu.memory_space<vmem>>, vector<64x32xbf16>
      tpu.vector_store %arg14[%c0_47, %c0_48], %84 {strides = array<i32>} : memref<64x32xbf16, #tpu.memory_space<vmem>>, vector<64x32xbf16>,
    } else {
    }
    %c0 = arith.constant 0 : index
    %c0_1 = arith.constant 0 : index
    %3 = vector.load %arg14[%c0, %c0_1] : memref<64x32xbf16, #tpu.memory_space<vmem>>, vector<64x32xbf16>
    %c0_2 = arith.constant 0 : index
    %c0_3 = arith.constant 0 : index
    %c0_4 = arith.constant 0 : index
    %4 = vector.load %arg5[%c0_2, %c0_3, %c0_4] : memref<1x32x8xbf16, #tpu.memory_space<vmem>>, vector<1x32x8xbf16>
    %5 = vector.shape_cast %4 : vector<1x32x8xbf16> to vector<32x8xbf16>
    %cst = arith.constant dense<0.000000e+00> : vector<64x8xf32>
    %6 = tpu.matmul %3, %5, %cst {dimension_numbers = #tpu.dot_dimension_numbers<[1], [0], [0], [1], [0, 0, 1, 1], [], []>} : vector<64x32xbf16>, vector<32x8xbf16>, vector<64x8xf32> -> vector<64x8xf32>
    %c0_5 = arith.constant 0 : index
    %c0_6 = arith.constant 0 : index
    %c0_7 = arith.constant 0 : index
    %7 = vector.load %arg8[%c0_5, %c0_6, %c0_7] : memref<1x1x8xf32, #tpu.memory_space<vmem>>, vector<1x1x8xf32>
    %8 = vector.shape_cast %7 : vector<1x1x8xf32> to vector<1x8xf32>
    %9 = vector.broadcast %8 : vector<1x8xf32> to vector<64x8xf32>
    %10 = arith.addf %6, %9 : vector<64x8xf32>
    %11 = arith.truncf %10 : vector<64x8xf32> to vector<64x8xbf16>
    %12 = vector.shape_cast %11 : vector<64x8xbf16> to vector<4x16x8xbf16>
    %c0_8 = arith.constant 0 : index
    %c0_9 = arith.constant 0 : index
    %c0_10 = arith.constant 0 : index
    %13 = vector.load %arg6[%c0_8, %c0_9, %c0_10] : memref<1x32x8xbf16, #tpu.memory_space<vmem>>, vector<1x32x8xbf16>
    %14 = vector.shape_cast %13 : vector<1x32x8xbf16> to vector<32x8xbf16>
    %cst_11 = arith.constant dense<0.000000e+00> : vector<64x8xf32>
    %15 = tpu.matmul %3, %14, %cst_11 {dimension_numbers = #tpu.dot_dimension_numbers<[1], [0], [0], [1], [0, 0, 1, 1], [], []>} : vector<64x32xbf16>, vector<32x8xbf16>, vector<64x8xf32> -> vector<64x8xf32>
    %c0_12 = arith.constant 0 : index
    %c0_13 = arith.constant 0 : index
    %c0_14 = arith.constant 0 : index
    %16 = vector.load %arg9[%c0_12, %c0_13, %c0_14] : memref<1x1x8xf32, #tpu.memory_space<vmem>>, vector<1x1x8xf32>
    %17 = vector.shape_cast %16 : vector<1x1x8xf32> to vector<1x8xf32>
    %18 = vector.broadcast %17 : vector<1x8xf32> to vector<64x8xf32>
    %19 = arith.addf %15, %18 : vector<64x8xf32>
    %20 = arith.truncf %19 : vector<64x8xf32> to vector<64x8xbf16>
    %21 = vector.shape_cast %20 : vector<64x8xbf16> to vector<4x16x8xbf16>
    %c0_15 = arith.constant 0 : index
    %c0_16 = arith.constant 0 : index
    %c0_17 = arith.constant 0 : index
    %22 = vector.load %arg7[%c0_15, %c0_16, %c0_17] : memref<1x32x8xbf16, #tpu.memory_space<vmem>>, vector<1x32x8xbf16>
    %23 = vector.shape_cast %22 : vector<1x32x8xbf16> to vector<32x8xbf16>
    %cst_18 = arith.constant dense<0.000000e+00> : vector<64x8xf32>
    %24 = tpu.matmul %3, %23, %cst_18 {dimension_numbers = #tpu.dot_dimension_numbers<[1], [0], [0], [1], [0, 0, 1, 1], [], []>} : vector<64x32xbf16>, vector<32x8xbf16>, vector<64x8xf32> -> vector<64x8xf32>
    %c0_19 = arith.constant 0 : index
    %c0_20 = arith.constant 0 : index
    %c0_21 = arith.constant 0 : index
    %25 = vector.load %arg10[%c0_19, %c0_20, %c0_21] : memref<1x1x8xf32, #tpu.memory_space<vmem>>, vector<1x1x8xf32>
    %26 = vector.shape_cast %25 : vector<1x1x8xf32> to vector<1x8xf32>
    %27 = vector.broadcast %26 : vector<1x8xf32> to vector<64x8xf32>
    %28 = arith.addf %24, %27 : vector<64x8xf32>
    %29 = arith.truncf %28 : vector<64x8xf32> to vector<64x8xbf16>
    %30 = vector.shape_cast %29 : vector<64x8xbf16> to vector<4x16x8xbf16>
    "tpu.trace_start"() <{level = 10 : i32, message = "wqd,wkd->wqk"}> : () -> ()
    %cst_22 = arith.constant dense<0.000000e+00> : vector<4x16x16xf32>
    %31 = tpu.matmul %12, %21, %cst_22 {dimension_numbers = #tpu.dot_dimension_numbers<[2], [2], [1], [1], [0, 0, 0, 1, 1, 1], [0], [0]>} : vector<4x16x8xbf16>, vector<4x16x8xbf16>, vector<4x16x16xf32> -> vector<4x16x16xf32>
    "tpu.trace_stop"() : () -> ()
    %cst_23 = arith.constant dense<0xFF800000> : vector<4x16xf32>
    %32 = vector.multi_reduction <maximumf>, %31, %cst_23 [2] : vector<4x16x16xf32> to vector<4x16xf32>
    %33 = vector.shape_cast %32 : vector<4x16xf32> to vector<4x16x1xf32>
    %34 = vector.broadcast %33 : vector<4x16x1xf32> to vector<4x16x16xf32>
    %35 = arith.subf %31, %34 : vector<4x16x16xf32>
    %36 = math.exp %35 : vector<4x16x16xf32>
    %cst_24 = arith.constant dense<0.000000e+00> : vector<4x16xf32>
    %37 = vector.multi_reduction <add>, %36, %cst_24 [2] : vector<4x16x16xf32> to vector<4x16xf32>
    %38 = vector.shape_cast %37 : vector<4x16xf32> to vector<4x16x1xf32>
    %39 = tpu.reciprocal %38 {approx = true} : vector<4x16x1xf32> -> vector<4x16x1xf32>
    %40 = vector.broadcast %39 : vector<4x16x1xf32> to vector<4x16x16xf32>
    %41 = arith.mulf %36, %40 : vector<4x16x16xf32>
    %42 = arith.truncf %41 : vector<4x16x16xf32> to vector<4x16x16xbf16>
    "tpu.trace_start"() <{level = 10 : i32, message = "wqk,wkd->wqd"}> : () -> ()
    %cst_25 = arith.constant dense<0.000000e+00> : vector<4x16x8xf32>
    %43 = tpu.matmul %42, %30, %cst_25 {dimension_numbers = #tpu.dot_dimension_numbers<[2], [1], [1], [2], [0, 0, 0, 1, 1, 2], [0], [0]>} : vector<4x16x16xbf16>, vector<4x16x8xbf16>, vector<4x16x8xf32> -> vector<4x16x8xf32>
    "tpu.trace_stop"() : () -> ()
    %44 = vector.shape_cast %43 : vector<4x16x8xf32> to vector<64x8xf32>
    %45 = arith.truncf %44 : vector<64x8xf32> to vector<64x8xbf16>
    %c0_26 = arith.constant 0 : index
    %c0_27 = arith.constant 0 : index
    %c0_28 = arith.constant 0 : index
    %46 = vector.load %arg11[%c0_26, %c0_27, %c0_28] : memref<1x8x32xbf16, #tpu.memory_space<vmem>>, vector<1x8x32xbf16>
    %47 = vector.shape_cast %46 : vector<1x8x32xbf16> to vector<8x32xbf16>
    %cst_29 = arith.constant dense<0.000000e+00> : vector<64x32xf32>
    %48 = tpu.matmul %45, %47, %cst_29 {dimension_numbers = #tpu.dot_dimension_numbers<[1], [0], [0], [1], [0, 0, 1, 1], [], []>} : vector<64x8xbf16>, vector<8x32xbf16>, vector<64x32xf32> -> vector<64x32xf32>
    %c0_i32_30 = arith.constant 0 : i32
    %49 = arith.cmpi eq, %arg1, %c0_i32_30 : i32
    %50 = arith.extui %49 : i1 to i32
    %c0_i32_31 = arith.constant 0 : i32
    %51 = arith.cmpi ne, %50, %c0_i32_31 : i32
    scf.if %51 {
      %c0_35 = arith.constant 0 : index
      %c0_36 = arith.constant 0 : index
      %58 = vector.load %arg15[%c0_35, %c0_36] : memref<64x32xf32, #tpu.memory_space<vmem>>, vector<64x32xf32>
      tpu.vector_store %arg15[%c0_35, %c0_36], %48 {strides = array<i32>} : memref<64x32xf32, #tpu.memory_space<vmem>>, vector<64x32xf32>,
    } else {
    }
    %c0_i32_32 = arith.constant 0 : i32
    %52 = arith.cmpi sgt, %arg1, %c0_i32_32 : i32
    %53 = arith.extui %52 : i1 to i32
    %c0_i32_33 = arith.constant 0 : i32
    %54 = arith.cmpi ne, %53, %c0_i32_33 : i32
    scf.if %54 {
      %c0_35 = arith.constant 0 : index
      %c0_36 = arith.constant 0 : index
      %58 = vector.load %arg15[%c0_35, %c0_36] : memref<64x32xf32, #tpu.memory_space<vmem>>, vector<64x32xf32>
      %59 = arith.addf %58, %48 : vector<64x32xf32>
      %c0_37 = arith.constant 0 : index
      %c0_38 = arith.constant 0 : index
      %60 = vector.load %arg15[%c0_37, %c0_38] : memref<64x32xf32, #tpu.memory_space<vmem>>, vector<64x32xf32>
      tpu.vector_store %arg15[%c0_37, %c0_38], %59 {strides = array<i32>} : memref<64x32xf32, #tpu.memory_space<vmem>>, vector<64x32xf32>,
    } else {
    }
    %c3_i32 = arith.constant 3 : i32
    %55 = arith.cmpi eq, %arg1, %c3_i32 : i32
    %56 = arith.extui %55 : i1 to i32
    %c0_i32_34 = arith.constant 0 : i32
    %57 = arith.cmpi ne, %56, %c0_i32_34 : i32
    scf.if %57 {
      %c0_35 = arith.constant 0 : index
      %c0_36 = arith.constant 0 : index
      %58 = vector.load %arg15[%c0_35, %c0_36] : memref<64x32xf32, #tpu.memory_space<vmem>>, vector<64x32xf32>
      %c0_37 = arith.constant 0 : index
      %c0_38 = arith.constant 0 : index
      %59 = vector.load %arg12[%c0_37, %c0_38] : memref<1x32xf32, #tpu.memory_space<vmem>>, vector<1x32xf32>
      %60 = vector.broadcast %59 : vector<1x32xf32> to vector<64x32xf32>
      %61 = arith.addf %58, %60 : vector<64x32xf32>
      %62 = vector.shape_cast %61 : vector<64x32xf32> to vector<4x16x32xf32>
      %c0_39 = arith.constant 0 : index
      %c0_40 = arith.constant 0 : index
      %c0_41 = arith.constant 0 : index
      %63 = vector.load %arg13[%c0_39, %c0_40, %c0_41] : memref<4x16x32xf32, #tpu.memory_space<vmem>>, vector<4x16x32xf32>
      tpu.vector_store %arg13[%c0_39, %c0_40, %c0_41], %62 {strides = array<i32>} : memref<4x16x32xf32, #tpu.memory_space<vmem>>, vector<4x16x32xf32>,
    } else {
    }
    return
  }
  func.func @transform_0(%arg0: i32, %arg1: i32) -> (i32, i32, i32) {
    %c0_i32 = arith.constant 0 : i32
    %c0_i32_0 = arith.constant 0 : i32
    %c0_i32_1 = arith.constant 0 : i32
    return %arg0, %c0_i32, %c0_i32_0 : i32, i32, i32
  }
  func.func @transform_1(%arg0: i32, %arg1: i32) -> (i32, i32) {
    %c0_i32 = arith.constant 0 : i32
    %c0_i32_0 = arith.constant 0 : i32
    %c0_i32_1 = arith.constant 0 : i32
    return %c0_i32, %c0_i32_0 : i32, i32
  }
  func.func @transform_2(%arg0: i32, %arg1: i32) -> (i32, i32) {
    %c0_i32 = arith.constant 0 : i32
    %c0_i32_0 = arith.constant 0 : i32
    %c0_i32_1 = arith.constant 0 : i32
    return %c0_i32, %c0_i32_0 : i32, i32
  }
  func.func @transform_3(%arg0: i32, %arg1: i32) -> (i32, i32, i32) {
    %c0_i32 = arith.constant 0 : i32
    %c0_i32_0 = arith.constant 0 : i32
    %c0_i32_1 = arith.constant 0 : i32
    return %arg1, %c0_i32, %c0_i32_0 : i32, i32, i32
  }
  func.func @transform_4(%arg0: i32, %arg1: i32) -> (i32, i32, i32) {
    %c0_i32 = arith.constant 0 : i32
    %c0_i32_0 = arith.constant 0 : i32
    %c0_i32_1 = arith.constant 0 : i32
    return %arg1, %c0_i32, %c0_i32_0 : i32, i32, i32
  }
  func.func @transform_5(%arg0: i32, %arg1: i32) -> (i32, i32, i32) {
    %c0_i32 = arith.constant 0 : i32
    %c0_i32_0 = arith.constant 0 : i32
    %c0_i32_1 = arith.constant 0 : i32
    return %arg1, %c0_i32, %c0_i32_0 : i32, i32, i32
  }
  func.func @transform_6(%arg0: i32, %arg1: i32) -> (i32, i32, i32) {
    %c0_i32 = arith.constant 0 : i32
    %c0_i32_0 = arith.constant 0 : i32
    %c0_i32_1 = arith.constant 0 : i32
    return %arg1, %c0_i32, %c0_i32_0 : i32, i32, i32
  }
  func.func @transform_7(%arg0: i32, %arg1: i32) -> (i32, i32, i32) {
    %c0_i32 = arith.constant 0 : i32
    %c0_i32_0 = arith.constant 0 : i32
    %c0_i32_1 = arith.constant 0 : i32
    return %arg1, %c0_i32, %c0_i32_0 : i32, i32, i32
  }
  func.func @transform_8(%arg0: i32, %arg1: i32) -> (i32, i32, i32) {
    %c0_i32 = arith.constant 0 : i32
    %c0_i32_0 = arith.constant 0 : i32
    %c0_i32_1 = arith.constant 0 : i32
    return %arg1, %c0_i32, %c0_i32_0 : i32, i32, i32
  }
  func.func @transform_9(%arg0: i32, %arg1: i32) -> (i32, i32, i32) {
    %c0_i32 = arith.constant 0 : i32
    %c0_i32_0 = arith.constant 0 : i32
    %c0_i32_1 = arith.constant 0 : i32
    return %arg1, %c0_i32, %c0_i32_0 : i32, i32, i32
  }
  func.func @transform_10(%arg0: i32, %arg1: i32) -> (i32, i32) {
    %c0_i32 = arith.constant 0 : i32
    %c0_i32_0 = arith.constant 0 : i32
    %c0_i32_1 = arith.constant 0 : i32
    return %c0_i32, %c0_i32_0 : i32, i32
  }
  func.func @transform_11(%arg0: i32, %arg1: i32) -> (i32, i32, i32) {
    %c0_i32 = arith.constant 0 : i32
    %c0_i32_0 = arith.constant 0 : i32
    %c0_i32_1 = arith.constant 0 : i32
    return %arg0, %c0_i32, %c0_i32_0 : i32, i32, i32
  }
}

</mosaic_0001>

<llo_original>
// kernel: tpu_custom_call.1
$region0: #{tpu_custom_call.1}
  #allocation0 [shape = 'u32[]', space=smem, size = 0x4, offset = 0x4, fixed_abs, tag = 'smem constant byte address 0x4 - core index']
  #allocation1 [shape = 'u32[144,128]{1,0:T(1,128)}', space=vmem, size = 0x12000, scoped, tag = 'internal scratch']
  #allocation2 [shape = 'bf16[64,32]{1,0:T(8,128)(2,1)}', space=vmem, size = 0x4000, scoped, tag = 'scratch operand']
  #allocation3 [shape = 'f32[64,32]{1,0:T(8,128)}', space=vmem, size = 0x8000, scoped, tag = 'scratch operand']
  %s0 = inlined_call_operand.vmem [shape: f32[8,16,32], index: 0, kind: input, shape index: {}]
  %s1 = inlined_call_operand.vmem [shape: f32[1,32], index: 1, kind: input, shape index: {}]
  %s2 = inlined_call_operand.vmem [shape: f32[1,32], index: 2, kind: input, shape index: {}]
  %s3 = inlined_call_operand.vmem [shape: bf16[4,32,8], index: 3, kind: input, shape index: {}]
  %s4 = inlined_call_operand.vmem [shape: bf16[4,32,8], index: 4, kind: input, shape index: {}]
  %s5 = inlined_call_operand.vmem [shape: bf16[4,32,8], index: 5, kind: input, shape index: {}]
  %s6 = inlined_call_operand.vmem [shape: f32[4,1,8], index: 6, kind: input, shape index: {}]
  %s7 = inlined_call_operand.vmem [shape: f32[4,1,8], index: 7, kind: input, shape index: {}]
  %s8 = inlined_call_operand.vmem [shape: f32[4,1,8], index: 8, kind: input, shape index: {}]
  %s9 = inlined_call_operand.vmem [shape: bf16[4,8,32], index: 9, kind: input, shape index: {}]
  %s10 = inlined_call_operand.vmem [shape: f32[1,32], index: 10, kind: input, shape index: {}]
  %s11 = inlined_call_operand.hbm [shape: f32[8,16,32], index: 11, kind: output, shape index: {}]
  %s12 = sld [smem:[#allocation0]]
  $region93: #{tpu_custom_call.1} parent=0
    _
  %s14 = ssub.s32 1, %s12
  %s15 = scalar_select 0, %s14, %s12
  $region1: #{tpu_custom_call.1} parent=0
    #allocation4 [shape = 'u8[65536]{0}', space=vmem, size = 0x10000, scoped, tag = 'output window, operand 0']
    #allocation5 [shape = 's32[2]{0}', space=sflag, size = 0x8, scoped, tag = 'scoped memory for tpu_custom_call.1']
    %16 = vsyncpa [#allocation5], 0
    %s17 = scalar_lea.sflag [#allocation5], 1
    %18 = vsyncpa %s17, 0
    loop: start=0, step=1, limit=10
    $region2: #{tpu_custom_call.1} parent=1 // loop_pre_header
      _
    $region3: #{tpu_custom_call.1} parent=1 // loop_header
      %s20 = sphi 0, %s24
      %p21 = scmp.ge.s32.totalorder %s20, 10
      %s27 = sphi 0, %s39
      %s28 = sphi 0, %s35
      %s29 = sphi 0, %s27
      %s30 = sphi 0, %s28
      %s31 = sphi 0, %s29
      %s32 = sphi 0, %s30
      %s42 = sphi 0, %s44
      %s45 = sphi 0, %s42
      %s46 = sphi 0, %s45
      %s62 = sphi 0, %s46
      %s66 = sphi 0, %s66
      %s68 = sphi 0, %s66
      %s69 = sphi 0, %s68
      %s83 = sphi 0, %s69
      %s87 = sphi 0, %s87
      %s89 = sphi 0, %s87
      %s90 = sphi 0, %s89
      %s104 = sphi 0, %s90
      %s110 = sphi 0, %s112
      %s113 = sphi 0, %s110
      %s114 = sphi 0, %s113
      %s130 = sphi 0, %s114
      %s136 = sphi 0, %s138
      %s139 = sphi 0, %s136
      %s140 = sphi 0, %s139
      %s156 = sphi 0, %s140
      %s162 = sphi 0, %s164
      %s165 = sphi 0, %s162
      %s166 = sphi 0, %s165
      %s182 = sphi 0, %s166
      %s188 = sphi 0, %s190
      %s191 = sphi 0, %s188
      %s192 = sphi 0, %s191
      %s208 = sphi 0, %s192
      %s214 = sphi 0, %s216
      %s217 = sphi 0, %s214
      %s218 = sphi 0, %s217
      %s234 = sphi 0, %s218
      %s240 = sphi 0, %s242
      %s243 = sphi 0, %s240
      %s244 = sphi 0, %s243
      %s260 = sphi 0, %s244
      %s266 = sphi 0, %s268
      %s269 = sphi 0, %s266
      %s270 = sphi 0, %s269
      %s286 = sphi 0, %s270
      %s290 = sphi 0, %s290
      %s292 = sphi 0, %s290
      %s293 = sphi 0, %s292
      %s307 = sphi 0, %s293
      %s313 = sphi 0, %s315
      %s316 = sphi 0, %s313
      %s317 = sphi 0, %s316
      %s333 = sphi 0, %s317
    $region4: #{tpu_custom_call.1} parent=1 // loop_header_branch
      %23 = sbr.rel (%p21) target = $region8
    $region5: #{tpu_custom_call.1} parent=1 // loop_body
      %s25 = ssub.s32 %s20, 1
      %s26 = ssub.s32 %s20, 2
      %s33 = sadd.s32 1, %s28
      %p34 = scmp.ge.s32.totalorder %s33, 4
      %s35 = scalar_select %p34, 0, %s33
      %s36 = sadd.s32 1, %s27
      %s37 = scalar_select %p34, %s36, %s27
      %p38 = scmp.ge.s32.totalorder %s37, 2
      %s39 = scalar_select %p38, 0, %s37
      %s40 = ssub.s32 %s27, %s39
      %p41 = scmp.eq.s32.totalorder %s40, 0
      %s43 = sadd.s32 %s42, 1
      %s44 = scalar_select %p41, %s42, %s43
      %p47 = pneg %p41
      %p48 = scmp.eq.s32.totalorder %s20, 7
      %p49 = por %p47, %p48
      %p50 = scmp.ne.s32.totalorder %s42, %s45
      %p51 = scmp.eq.s32.totalorder %s20, 0
      %p52 = por %p50, %p51
      %p53 = scmp.ne.s32.totalorder %s42, %s45
      %p54 = scmp.eq.s32.totalorder %s25, 7
      %p55 = por %p53, %p54
      %p56 = scmp.ne.s32.totalorder %s45, %s46
      %p57 = scmp.eq.s32.totalorder %s25, 0
      %p58 = por %p56, %p57
      %p59 = scmp.ne.s32.totalorder %s45, %s46
      %p60 = scmp.eq.s32.totalorder %s26, 7
      %p61 = por %p59, %p60
      %p63 = scmp.ne.s32.totalorder %s46, %s62
      %p64 = scmp.eq.s32.totalorder %s26, 0
      %p65 = por %p63, %p64
      %s67 = sadd.s32 %s66, 1
      %p70 = scmp.eq.s32.totalorder %s20, 7
      %p71 = scmp.ne.s32.totalorder %s66, %s68
      %p72 = scmp.eq.s32.totalorder %s20, 0
      %p73 = por %p71, %p72
      %p74 = scmp.ne.s32.totalorder %s66, %s68
      %p75 = scmp.eq.s32.totalorder %s25, 7
      %p76 = por %p74, %p75
      %p77 = scmp.ne.s32.totalorder %s68, %s69
      %p78 = scmp.eq.s32.totalorder %s25, 0
      %p79 = por %p77, %p78
      %p80 = scmp.ne.s32.totalorder %s68, %s69
      %p81 = scmp.eq.s32.totalorder %s26, 7
      %p82 = por %p80, %p81
      %p84 = scmp.ne.s32.totalorder %s69, %s83
      %p85 = scmp.eq.s32.totalorder %s26, 0
      %p86 = por %p84, %p85
      %s88 = sadd.s32 %s87, 1
      %p91 = scmp.eq.s32.totalorder %s20, 7
      %p92 = scmp.ne.s32.totalorder %s87, %s89
      %p93 = scmp.eq.s32.totalorder %s20, 0
      %p94 = por %p92, %p93
      %p95 = scmp.ne.s32.totalorder %s87, %s89
      %p96 = scmp.eq.s32.totalorder %s25, 7
      %p97 = por %p95, %p96
      %p98 = scmp.ne.s32.totalorder %s89, %s90
      %p99 = scmp.eq.s32.totalorder %s25, 0
      %p100 = por %p98, %p99
      %p101 = scmp.ne.s32.totalorder %s89, %s90
      %p102 = scmp.eq.s32.totalorder %s26, 7
      %p103 = por %p101, %p102
      %p105 = scmp.ne.s32.totalorder %s90, %s104
      %p106 = scmp.eq.s32.totalorder %s26, 0
      %p107 = por %p105, %p106
      %s108 = ssub.s32 %s28, %s35
      %p109 = scmp.eq.s32.totalorder %s108, 0
      %s111 = sadd.s32 %s110, 1
      %s112 = scalar_select %p109, %s110, %s111
      %p115 = pneg %p109
      %p116 = scmp.eq.s32.totalorder %s20, 7
      %p117 = por %p115, %p116
      %p118 = scmp.ne.s32.totalorder %s110, %s113
      %p119 = scmp.eq.s32.totalorder %s20, 0
      %p120 = por %p118, %p119
      %p121 = scmp.ne.s32.totalorder %s110, %s113
      %p122 = scmp.eq.s32.totalorder %s25, 7
      %p123 = por %p121, %p122
      %p124 = scmp.ne.s32.totalorder %s113, %s114
      %p125 = scmp.eq.s32.totalorder %s25, 0
      %p126 = por %p124, %p125
      %p127 = scmp.ne.s32.totalorder %s113, %s114
      %p128 = scmp.eq.s32.totalorder %s26, 7
      %p129 = por %p127, %p128
      %p131 = scmp.ne.s32.totalorder %s114, %s130
      %p132 = scmp.eq.s32.totalorder %s26, 0
      %p133 = por %p131, %p132
      %s134 = ssub.s32 %s28, %s35
      %p135 = scmp.eq.s32.totalorder %s134, 0
      %s137 = sadd.s32 %s136, 1
      %s138 = scalar_select %p135, %s136, %s137
      %p141 = pneg %p135
      %p142 = scmp.eq.s32.totalorder %s20, 7
      %p143 = por %p141, %p142
      %p144 = scmp.ne.s32.totalorder %s136, %s139
      %p145 = scmp.eq.s32.totalorder %s20, 0
      %p146 = por %p144, %p145
      %p147 = scmp.ne.s32.totalorder %s136, %s139
      %p148 = scmp.eq.s32.totalorder %s25, 7
      %p149 = por %p147, %p148
      %p150 = scmp.ne.s32.totalorder %s139, %s140
      %p151 = scmp.eq.s32.totalorder %s25, 0
      %p152 = por %p150, %p151
      %p153 = scmp.ne.s32.totalorder %s139, %s140
      %p154 = scmp.eq.s32.totalorder %s26, 7
      %p155 = por %p153, %p154
      %p157 = scmp.ne.s32.totalorder %s140, %s156
      %p158 = scmp.eq.s32.totalorder %s26, 0
      %p159 = por %p157, %p158
      %s160 = ssub.s32 %s28, %s35
      %p161 = scmp.eq.s32.totalorder %s160, 0
      %s163 = sadd.s32 %s162, 1
      %s164 = scalar_select %p161, %s162, %s163
      %p167 = pneg %p161
      %p168 = scmp.eq.s32.totalorder %s20, 7
      %p169 = por %p167, %p168
      %p170 = scmp.ne.s32.totalorder %s162, %s165
      %p171 = scmp.eq.s32.totalorder %s20, 0
      %p172 = por %p170, %p171
      %p173 = scmp.ne.s32.totalorder %s162, %s165
      %p174 = scmp.eq.s32.totalorder %s25, 7
      %p175 = por %p173, %p174
      %p176 = scmp.ne.s32.totalorder %s165, %s166
      %p177 = scmp.eq.s32.totalorder %s25, 0
      %p178 = por %p176, %p177
      %p179 = scmp.ne.s32.totalorder %s165, %s166
      %p180 = scmp.eq.s32.totalorder %s26, 7
      %p181 = por %p179, %p180
      %p183 = scmp.ne.s32.totalorder %s166, %s182
      %p184 = scmp.eq.s32.totalorder %s26, 0
      %p185 = por %p183, %p184
      %s186 = ssub.s32 %s28, %s35
      %p187 = scmp.eq.s32.totalorder %s186, 0
      %s189 = sadd.s32 %s188, 1
      %s190 = scalar_select %p187, %s188, %s189
      %p193 = pneg %p187
      %p194 = scmp.eq.s32.totalorder %s20, 7
      %p195 = por %p193, %p194
      %p196 = scmp.ne.s32.totalorder %s188, %s191
      %p197 = scmp.eq.s32.totalorder %s20, 0
      %p198 = por %p196, %p197
      %p199 = scmp.ne.s32.totalorder %s188, %s191
      %p200 = scmp.eq.s32.totalorder %s25, 7
      %p201 = por %p199, %p200
      %p202 = scmp.ne.s32.totalorder %s191, %s192
      %p203 = scmp.eq.s32.totalorder %s25, 0
      %p204 = por %p202, %p203
      %p205 = scmp.ne.s32.totalorder %s191, %s192
      %p206 = scmp.eq.s32.totalorder %s26, 7
      %p207 = por %p205, %p206
      %p209 = scmp.ne.s32.totalorder %s192, %s208
      %p210 = scmp.eq.s32.totalorder %s26, 0
      %p211 = por %p209, %p210
      %s212 = ssub.s32 %s28, %s35
      %p213 = scmp.eq.s32.totalorder %s212, 0
      %s215 = sadd.s32 %s214, 1
      %s216 = scalar_select %p213, %s214, %s215
      %p219 = pneg %p213
      %p220 = scmp.eq.s32.totalorder %s20, 7
      %p221 = por %p219, %p220
      %p222 = scmp.ne.s32.totalorder %s214, %s217
      %p223 = scmp.eq.s32.totalorder %s20, 0
      %p224 = por %p222, %p223
      %p225 = scmp.ne.s32.totalorder %s214, %s217
      %p226 = scmp.eq.s32.totalorder %s25, 7
      %p227 = por %p225, %p226
      %p228 = scmp.ne.s32.totalorder %s217, %s218
      %p229 = scmp.eq.s32.totalorder %s25, 0
      %p230 = por %p228, %p229
      %p231 = scmp.ne.s32.totalorder %s217, %s218
      %p232 = scmp.eq.s32.totalorder %s26, 7
      %p233 = por %p231, %p232
      %p235 = scmp.ne.s32.totalorder %s218, %s234
      %p236 = scmp.eq.s32.totalorder %s26, 0
      %p237 = por %p235, %p236
      %s238 = ssub.s32 %s28, %s35
      %p239 = scmp.eq.s32.totalorder %s238, 0
      %s241 = sadd.s32 %s240, 1
      %s242 = scalar_select %p239, %s240, %s241
      %p245 = pneg %p239
      %p246 = scmp.eq.s32.totalorder %s20, 7
      %p247 = por %p245, %p246
      %p248 = scmp.ne.s32.totalorder %s240, %s243
      %p249 = scmp.eq.s32.totalorder %s20, 0
      %p250 = por %p248, %p249
      %p251 = scmp.ne.s32.totalorder %s240, %s243
      %p252 = scmp.eq.s32.totalorder %s25, 7
      %p253 = por %p251, %p252
      %p254 = scmp.ne.s32.totalorder %s243, %s244
      %p255 = scmp.eq.s32.totalorder %s25, 0
      %p256 = por %p254, %p255
      %p257 = scmp.ne.s32.totalorder %s243, %s244
      %p258 = scmp.eq.s32.totalorder %s26, 7
      %p259 = por %p257, %p258
      %p261 = scmp.ne.s32.totalorder %s244, %s260
      %p262 = scmp.eq.s32.totalorder %s26, 0
      %p263 = por %p261, %p262
      %s264 = ssub.s32 %s28, %s35
      %p265 = scmp.eq.s32.totalorder %s264, 0
      %s267 = sadd.s32 %s266, 1
      %s268 = scalar_select %p265, %s266, %s267
      %p271 = pneg %p265
      %p272 = scmp.eq.s32.totalorder %s20, 7
      %p273 = por %p271, %p272
      %p274 = scmp.ne.s32.totalorder %s266, %s269
      %p275 = scmp.eq.s32.totalorder %s20, 0
      %p276 = por %p274, %p275
      %p277 = scmp.ne.s32.totalorder %s266, %s269
      %p278 = scmp.eq.s32.totalorder %s25, 7
      %p279 = por %p277, %p278
      %p280 = scmp.ne.s32.totalorder %s269, %s270
      %p281 = scmp.eq.s32.totalorder %s25, 0
      %p282 = por %p280, %p281
      %p283 = scmp.ne.s32.totalorder %s269, %s270
      %p284 = scmp.eq.s32.totalorder %s26, 7
      %p285 = por %p283, %p284
      %p287 = scmp.ne.s32.totalorder %s270, %s286
      %p288 = scmp.eq.s32.totalorder %s26, 0
      %p289 = por %p287, %p288
      %s291 = sadd.s32 %s290, 1
      %p294 = scmp.eq.s32.totalorder %s20, 7
      %p295 = scmp.ne.s32.totalorder %s290, %s292
      %p296 = scmp.eq.s32.totalorder %s20, 0
      %p297 = por %p295, %p296
      %p298 = scmp.ne.s32.totalorder %s290, %s292
      %p299 = scmp.eq.s32.totalorder %s25, 7
      %p300 = por %p298, %p299
      %p301 = scmp.ne.s32.totalorder %s292, %s293
      %p302 = scmp.eq.s32.totalorder %s25, 0
      %p303 = por %p301, %p302
      %p304 = scmp.ne.s32.totalorder %s292, %s293
      %p305 = scmp.eq.s32.totalorder %s26, 7
      %p306 = por %p304, %p305
      %p308 = scmp.ne.s32.totalorder %s293, %s307
      %p309 = scmp.eq.s32.totalorder %s26, 0
      %p310 = por %p308, %p309
      %s311 = ssub.s32 %s27, %s39
      %p312 = scmp.eq.s32.totalorder %s311, 0
      %s314 = sadd.s32 %s313, 1
      %s315 = scalar_select %p312, %s313, %s314
      %p318 = pneg %p312
      %p319 = scmp.eq.s32.totalorder %s20, 7
      %p320 = por %p318, %p319
      %p321 = scmp.ne.s32.totalorder %s313, %s316
      %p322 = scmp.eq.s32.totalorder %s20, 0
      %p323 = por %p321, %p322
      %p324 = scmp.ne.s32.totalorder %s313, %s316
      %p325 = scmp.eq.s32.totalorder %s25, 7
      %p326 = por %p324, %p325
      %p327 = scmp.ne.s32.totalorder %s316, %s317
      %p328 = scmp.eq.s32.totalorder %s25, 0
      %p329 = por %p327, %p328
      %p330 = scmp.ne.s32.totalorder %s316, %s317
      %p331 = scmp.eq.s32.totalorder %s26, 7
      %p332 = por %p330, %p331
      %p334 = scmp.ne.s32.totalorder %s317, %s333
      %p335 = scmp.eq.s32.totalorder %s26, 0
      %p336 = por %p334, %p335
      %p337 = scmp.le.s32.totalorder 1, %s20
      %p338 = scmp.lt.s32.totalorder %s20, 9
      %p339 = pnand %p337, %p338
      %p340 = pneg %p339
      // Predicated region
      $region9: #{tpu_custom_call.1} parent=5 // pred_check
        _
      $region10: #{tpu_custom_call.1} parent=5 // pred_check_branch
        %342 = sbr.rel (%p339) target = $region12
      $region11: #{tpu_custom_call.1} parent=5 // pred_region
        %s343 = ssub.s32 %s20, 1
        // Predicated region
        $region13: #{tpu_custom_call.1} parent=11 // pred_check
          %p344 = pneg %p79
        $region14: #{tpu_custom_call.1} parent=11 // pred_check_branch
          %346 = sbr.rel (%p344) target = $region16
        $region15: #{tpu_custom_call.1} parent=11 // pred_region
          _
        $region16: #{tpu_custom_call.1} parent=11 // pred_fallthru
          _
        // Predicated region
        $region17: #{tpu_custom_call.1} parent=11 // pred_check
          %p347 = pneg %p100
        $region18: #{tpu_custom_call.1} parent=11 // pred_check_branch
          %349 = sbr.rel (%p347) target = $region20
        $region19: #{tpu_custom_call.1} parent=11 // pred_region
          _
        $region20: #{tpu_custom_call.1} parent=11 // pred_fallthru
          _
        // Predicated region
        $region21: #{tpu_custom_call.1} parent=11 // pred_check
          %p350 = pneg %p303
        $region22: #{tpu_custom_call.1} parent=11 // pred_check_branch
          %352 = sbr.rel (%p350) target = $region24
        $region23: #{tpu_custom_call.1} parent=11 // pred_region
          _
        $region24: #{tpu_custom_call.1} parent=11 // pred_fallthru
          _
      $region12: #{tpu_custom_call.1} parent=5 // pred_fallthru
        _
      %p353 = scmp.lt.s32.totalorder %s20, 8
      // Predicated region
      $region25: #{tpu_custom_call.1} parent=5 // pred_check
        %p354 = pneg %p353
      $region26: #{tpu_custom_call.1} parent=5 // pred_check_branch
        %356 = sbr.rel (%p354) target = $region28
      $region27: #{tpu_custom_call.1} parent=5 // pred_region
        // Predicated region
        $region29: #{tpu_custom_call.1} parent=27 // pred_check
          %p357 = pneg %p52
        $region30: #{tpu_custom_call.1} parent=27 // pred_check_branch
          %359 = sbr.rel (%p357) target = $region32
        $region31: #{tpu_custom_call.1} parent=27 // pred_region
          %s360 = smul.u32 4, %s27
          %p361 = scmp.lt.s32.totalorder %s360, 7
          %s362 = scalar_select %p361, %s360, 7
          %s363 = smul.addr %s362, 2
          %s364 = smul.addr %s363, 8
          %s365 = scalar_lea.vmem %s0, %s364
          %s366 = smul.u32 4, %s27
        $region32: #{tpu_custom_call.1} parent=27 // pred_fallthru
          _
        // Predicated region
        $region33: #{tpu_custom_call.1} parent=27 // pred_check
          %p367 = pneg %p120
        $region34: #{tpu_custom_call.1} parent=27 // pred_check_branch
          %369 = sbr.rel (%p367) target = $region36
        $region35: #{tpu_custom_call.1} parent=27 // pred_region
          %p370 = scmp.lt.s32.totalorder %s28, 3
          %s371 = scalar_select %p370, %s28, 3
          %s372 = smul.addr %s371, 4
          %s373 = smul.addr %s372, 4
          %s374 = scalar_lea.vmem %s3, %s373
        $region36: #{tpu_custom_call.1} parent=27 // pred_fallthru
          _
        // Predicated region
        $region37: #{tpu_custom_call.1} parent=27 // pred_check
          %p375 = pneg %p146
        $region38: #{tpu_custom_call.1} parent=27 // pred_check_branch
          %377 = sbr.rel (%p375) target = $region40
        $region39: #{tpu_custom_call.1} parent=27 // pred_region
          %p378 = scmp.lt.s32.totalorder %s28, 3
          %s379 = scalar_select %p378, %s28, 3
          %s380 = smul.addr %s379, 4
          %s381 = smul.addr %s380, 4
          %s382 = scalar_lea.vmem %s4, %s381
        $region40: #{tpu_custom_call.1} parent=27 // pred_fallthru
          _
        // Predicated region
        $region41: #{tpu_custom_call.1} parent=27 // pred_check
          %p383 = pneg %p172
        $region42: #{tpu_custom_call.1} parent=27 // pred_check_branch
          %385 = sbr.rel (%p383) target = $region44
        $region43: #{tpu_custom_call.1} parent=27 // pred_region
          %p386 = scmp.lt.s32.totalorder %s28, 3
          %s387 = scalar_select %p386, %s28, 3
          %s388 = smul.addr %s387, 4
          %s389 = smul.addr %s388, 4
          %s390 = scalar_lea.vmem %s5, %s389
        $region44: #{tpu_custom_call.1} parent=27 // pred_fallthru
          _
        // Predicated region
        $region45: #{tpu_custom_call.1} parent=27 // pred_check
          %p391 = pneg %p198
        $region46: #{tpu_custom_call.1} parent=27 // pred_check_branch
          %393 = sbr.rel (%p391) target = $region48
        $region47: #{tpu_custom_call.1} parent=27 // pred_region
          %p394 = scmp.lt.s32.totalorder %s28, 3
          %s395 = scalar_select %p394, %s28, 3
          %s396 = scalar_lea.vmem %s6, %s395
        $region48: #{tpu_custom_call.1} parent=27 // pred_fallthru
          _
        // Predicated region
        $region49: #{tpu_custom_call.1} parent=27 // pred_check
          %p397 = pneg %p224
        $region50: #{tpu_custom_call.1} parent=27 // pred_check_branch
          %399 = sbr.rel (%p397) target = $region52
        $region51: #{tpu_custom_call.1} parent=27 // pred_region
          %p400 = scmp.lt.s32.totalorder %s28, 3
          %s401 = scalar_select %p400, %s28, 3
          %s402 = scalar_lea.vmem %s7, %s401
        $region52: #{tpu_custom_call.1} parent=27 // pred_fallthru
          _
        // Predicated region
        $region53: #{tpu_custom_call.1} parent=27 // pred_check
          %p403 = pneg %p250
        $region54: #{tpu_custom_call.1} parent=27 // pred_check_branch
          %405 = sbr.rel (%p403) target = $region56
        $region55: #{tpu_custom_call.1} parent=27 // pred_region
          %p406 = scmp.lt.s32.totalorder %s28, 3
          %s407 = scalar_select %p406, %s28, 3
          %s408 = scalar_lea.vmem %s8, %s407
        $region56: #{tpu_custom_call.1} parent=27 // pred_fallthru
          _
        // Predicated region
        $region57: #{tpu_custom_call.1} parent=27 // pred_check
          %p409 = pneg %p276
        $region58: #{tpu_custom_call.1} parent=27 // pred_check_branch
          %411 = sbr.rel (%p409) target = $region60
        $region59: #{tpu_custom_call.1} parent=27 // pred_region
          %p412 = scmp.lt.s32.totalorder %s28, 3
          %s413 = scalar_select %p412, %s28, 3
          %s414 = smul.addr %s413, 4
          %s415 = scalar_lea.vmem %s9, %s414
        $region60: #{tpu_custom_call.1} parent=27 // pred_fallthru
          _
      $region28: #{tpu_custom_call.1} parent=5 // pred_fallthru
        _
      %p416 = scmp.le.s32.totalorder 1, %s20
      %p417 = scmp.lt.s32.totalorder %s20, 9
      %p418 = pnand %p416, %p417
      %p419 = pneg %p418
      // Predicated region
      $region61: #{tpu_custom_call.1} parent=5 // pred_check
        _
      $region62: #{tpu_custom_call.1} parent=5 // pred_check_branch
        %421 = sbr.rel (%p418) target = $region64
      $region63: #{tpu_custom_call.1} parent=5 // pred_region
        %s422 = ssub.s32 %s20, 1
        %s423 = smul.u32 4, %s29
        %p424 = scmp.lt.s32.totalorder %s423, 7
        %s425 = scalar_select %p424, %s423, 7
        %s426 = smul.addr %s425, 2
        %s427 = smul.addr %s426, 8
        %s428 = scalar_lea.vmem %s0, %s427
        %p429 = pneg %p58
        %p430 = pneg %p55
        %p431 = pneg %p79
        %p432 = pneg %p76
        %p433 = pneg %p100
        %p434 = pneg %p97
        %p435 = scmp.lt.s32.totalorder %s30, 3
        %s436 = scalar_select %p435, %s30, 3
        %s437 = smul.addr %s436, 4
        %s438 = smul.addr %s437, 4
        %s439 = scalar_lea.vmem %s3, %s438
        %p440 = pneg %p126
        %p441 = pneg %p123
        %p442 = scmp.lt.s32.totalorder %s30, 3
        %s443 = scalar_select %p442, %s30, 3
        %s444 = smul.addr %s443, 4
        %s445 = smul.addr %s444, 4
        %s446 = scalar_lea.vmem %s4, %s445
        %p447 = pneg %p152
        %p448 = pneg %p149
        %p449 = scmp.lt.s32.totalorder %s30, 3
        %s450 = scalar_select %p449, %s30, 3
        %s451 = smul.addr %s450, 4
        %s452 = smul.addr %s451, 4
        %s453 = scalar_lea.vmem %s5, %s452
        %p454 = pneg %p178
        %p455 = pneg %p175
        %p456 = scmp.lt.s32.totalorder %s30, 3
        %s457 = scalar_select %p456, %s30, 3
        %s458 = scalar_lea.vmem %s6, %s457
        %p459 = pneg %p204
        %p460 = pneg %p201
        %p461 = scmp.lt.s32.totalorder %s30, 3
        %s462 = scalar_select %p461, %s30, 3
        %s463 = scalar_lea.vmem %s7, %s462
        %p464 = pneg %p230
        %p465 = pneg %p227
        %p466 = scmp.lt.s32.totalorder %s30, 3
        %s467 = scalar_select %p466, %s30, 3
        %s468 = scalar_lea.vmem %s8, %s467
        %p469 = pneg %p256
        %p470 = pneg %p253
        %p471 = scmp.lt.s32.totalorder %s30, 3
        %s472 = scalar_select %p471, %s30, 3
        %s473 = smul.addr %s472, 4
        %s474 = scalar_lea.vmem %s9, %s473
        %p475 = pneg %p282
        %p476 = pneg %p279
        %p477 = pneg %p303
        %p478 = pneg %p300
        %p479 = pneg %p329
        %p480 = pneg %p326
        %s481 = sand.u32 %s316, 1
        %s482 = scalar_lea.sflag [#allocation5], %s481
        %s483 = sand.u32 %s316, 1
        %s484 = smul.addr %s483, 64
        %s485 = scalar_lea.vmem [#allocation4], %s484
        %s486 = smul.u32 4, %s29
        %p487 = scmp.lt.s32.totalorder %s486, 7
        %s488 = scalar_select %p487, %s486, 7
        %s489 = smul.addr %s488, 2
        %s490 = smul.addr %s489, 8
        %s491 = scalar_lea.vmem %s0, %s490
        %s492 = smul.u32 4, %s29
        %p493 = scmp.lt.s32.totalorder %s30, 3
        %s494 = scalar_select %p493, %s30, 3
        %s495 = smul.addr %s494, 4
        %s496 = smul.addr %s495, 4
        %s497 = scalar_lea.vmem %s3, %s496
        %p498 = scmp.lt.s32.totalorder %s30, 3
        %s499 = scalar_select %p498, %s30, 3
        %s500 = smul.addr %s499, 4
        %s501 = smul.addr %s500, 4
        %s502 = scalar_lea.vmem %s4, %s501
        %p503 = scmp.lt.s32.totalorder %s30, 3
        %s504 = scalar_select %p503, %s30, 3
        %s505 = smul.addr %s504, 4
        %s506 = smul.addr %s505, 4
        %s507 = scalar_lea.vmem %s5, %s506
        %p508 = scmp.lt.s32.totalorder %s30, 3
        %s509 = scalar_select %p508, %s30, 3
        %s510 = scalar_lea.vmem %s6, %s509
        %p511 = scmp.lt.s32.totalorder %s30, 3
        %s512 = scalar_select %p511, %s30, 3
        %s513 = scalar_lea.vmem %s7, %s512
        %p514 = scmp.lt.s32.totalorder %s30, 3
        %s515 = scalar_select %p514, %s30, 3
        %s516 = scalar_lea.vmem %s8, %s515
        %p517 = scmp.lt.s32.totalorder %s30, 3
        %s518 = scalar_select %p517, %s30, 3
        %s519 = smul.addr %s518, 4
        %s520 = scalar_lea.vmem %s9, %s519
        %s521 = smul.u32 4, %s29
        %p523 = scmp.eq.s32.totalorder %s30, 0
        // Predicated region
        $region65: #{tpu_custom_call.1} parent=63 // pred_check
          %p524 = pneg %p523
        $region66: #{tpu_custom_call.1} parent=63 // pred_check_branch
          %526 = sbr.rel (%p524) target = $region68
        $region67: #{tpu_custom_call.1} parent=63 // pred_region
          %v527 = vld [vmem:[%s491] sm:$0xff]
          %v528 = vld [vmem:[%s491 + $0x8] sm:$0xff]
          %v529 = vld [vmem:[%s491 + $0x10] sm:$0xff]
          %v530 = vld [vmem:[%s491 + $0x18] sm:$0xff]
          %v531 = vld [vmem:[%s491 + $0x20] sm:$0xff]
          %v532 = vld [vmem:[%s491 + $0x28] sm:$0xff]
          %v533 = vld [vmem:[%s491 + $0x30] sm:$0xff]
          %v534 = vld [vmem:[%s491 + $0x38] sm:$0xff]
          %vm535 = vcmask 261120
          %v536 = vsel %vm535, %v527, 0.0
          %537 = vadd.xlane.f32.xlu0 %v536
          %v538 = vpop.xlane.xlu0 %537
          %v539 = vsel %vm535, %v528, 0.0
          %540 = vadd.xlane.f32.xlu0 %v539
          %v541 = vpop.xlane.xlu0 %540
          %v542 = vsel %vm535, %v529, 0.0
          %543 = vadd.xlane.f32.xlu0 %v542
          %v544 = vpop.xlane.xlu0 %543
          %v545 = vsel %vm535, %v530, 0.0
          %546 = vadd.xlane.f32.xlu0 %v545
          %v547 = vpop.xlane.xlu0 %546
          %v548 = vsel %vm535, %v531, 0.0
          %549 = vadd.xlane.f32.xlu0 %v548
          %v550 = vpop.xlane.xlu0 %549
          %v551 = vsel %vm535, %v532, 0.0
          %552 = vadd.xlane.f32.xlu0 %v551
          %v553 = vpop.xlane.xlu0 %552
          %v554 = vsel %vm535, %v533, 0.0
          %555 = vadd.xlane.f32.xlu0 %v554
          %v556 = vpop.xlane.xlu0 %555
          %v557 = vsel %vm535, %v534, 0.0
          %558 = vadd.xlane.f32.xlu0 %v557
          %v559 = vpop.xlane.xlu0 %558
          %v560 = vrcp.pop 32.0
          %v561 = vmul.f32 %v538, %v560
          %v562 = vmul.f32 %v541, %v560
          %v563 = vmul.f32 %v544, %v560
          %v564 = vmul.f32 %v547, %v560
          %v565 = vmul.f32 %v550, %v560
          %v566 = vmul.f32 %v553, %v560
          %v567 = vmul.f32 %v556, %v560
          %v568 = vmul.f32 %v559, %v560
          %v569 = vsub.f32 %v527, %v561
          %v570 = vsub.f32 %v528, %v562
          %v571 = vsub.f32 %v529, %v563
          %v572 = vsub.f32 %v530, %v564
          %v573 = vsub.f32 %v531, %v565
          %v574 = vsub.f32 %v532, %v566
          %v575 = vsub.f32 %v533, %v567
          %v576 = vsub.f32 %v534, %v568
          %v577 = vmul.f32 %v569, %v569
          %v578 = vmul.f32 %v570, %v570
          %v579 = vmul.f32 %v571, %v571
          %v580 = vmul.f32 %v572, %v572
          %v581 = vmul.f32 %v573, %v573
          %v582 = vmul.f32 %v574, %v574
          %v583 = vmul.f32 %v575, %v575
          %v584 = vmul.f32 %v576, %v576
          %v585 = vsel %vm535, %v577, 0.0
          %586 = vadd.xlane.f32.xlu0 %v585
          %v587 = vpop.xlane.xlu0 %586
          %v588 = vsel %vm535, %v578, 0.0
          %589 = vadd.xlane.f32.xlu0 %v588
          %v590 = vpop.xlane.xlu0 %589
          %v591 = vsel %vm535, %v579, 0.0
          %592 = vadd.xlane.f32.xlu0 %v591
          %v593 = vpop.xlane.xlu0 %592
          %v594 = vsel %vm535, %v580, 0.0
          %595 = vadd.xlane.f32.xlu0 %v594
          %v596 = vpop.xlane.xlu0 %595
          %v597 = vsel %vm535, %v581, 0.0
          %598 = vadd.xlane.f32.xlu0 %v597
          %v599 = vpop.xlane.xlu0 %598
          %v600 = vsel %vm535, %v582, 0.0
          %601 = vadd.xlane.f32.xlu0 %v600
          %v602 = vpop.xlane.xlu0 %601
          %v603 = vsel %vm535, %v583, 0.0
          %604 = vadd.xlane.f32.xlu0 %v603
          %v605 = vpop.xlane.xlu0 %604
          %v606 = vsel %vm535, %v584, 0.0
          %607 = vadd.xlane.f32.xlu0 %v606
          %v608 = vpop.xlane.xlu0 %607
          %v609 = vmul.f32 %v587, %v560
          %v610 = vmul.f32 %v590, %v560
          %v611 = vmul.f32 %v593, %v560
          %v612 = vmul.f32 %v596, %v560
          %v613 = vmul.f32 %v599, %v560
          %v614 = vmul.f32 %v602, %v560
          %v615 = vmul.f32 %v605, %v560
          %v616 = vmul.f32 %v608, %v560
          %v617 = vadd.f32 %v609, 1e-05
          %v618 = vadd.f32 %v610, 1e-05
          %v619 = vadd.f32 %v611, 1e-05
          %v620 = vadd.f32 %v612, 1e-05
          %v621 = vadd.f32 %v613, 1e-05
          %v622 = vadd.f32 %v614, 1e-05
          %v623 = vadd.f32 %v615, 1e-05
          %v624 = vadd.f32 %v616, 1e-05
          %v625 = vrsqrt.pop %v617
          %v626 = vrsqrt.pop %v618
          %v627 = vrsqrt.pop %v619
          %v628 = vrsqrt.pop %v620
          %v629 = vrsqrt.pop %v621
          %v630 = vrsqrt.pop %v622
          %v631 = vrsqrt.pop %v623
          %v632 = vrsqrt.pop %v624
          %v633 = vmul.f32 %v569, %v625
          %v634 = vmul.f32 %v570, %v626
          %v635 = vmul.f32 %v571, %v627
          %v636 = vmul.f32 %v572, %v628
          %v637 = vmul.f32 %v573, %v629
          %v638 = vmul.f32 %v574, %v630
          %v639 = vmul.f32 %v575, %v631
          %v640 = vmul.f32 %v576, %v632
          %v641 = vld [vmem:[%s1] sm:$0x1]
          %v643 = vlaneseq
          %v644 = vshrl.u32 %v643, 7
          %v645 = vsub.s32 0, %v644
          %v646 = vrot.slane %v641, %v645
          %v648 = vmul.f32 %v633, %v646
          %v649 = vmul.f32 %v634, %v646
          %v650 = vmul.f32 %v635, %v646
          %v651 = vmul.f32 %v636, %v646
          %v652 = vmul.f32 %v637, %v646
          %v653 = vmul.f32 %v638, %v646
          %v654 = vmul.f32 %v639, %v646
          %v655 = vmul.f32 %v640, %v646
          %v656 = vld [vmem:[%s2] sm:$0x1]
          %v658 = vlaneseq
          %v659 = vshrl.u32 %v658, 7
          %v660 = vsub.s32 0, %v659
          %v661 = vrot.slane %v656, %v660
          %v663 = vadd.f32 %v648, %v661
          %v664 = vadd.f32 %v649, %v661
          %v665 = vadd.f32 %v650, %v661
          %v666 = vadd.f32 %v651, %v661
          %v667 = vadd.f32 %v652, %v661
          %v668 = vadd.f32 %v653, %v661
          %v669 = vadd.f32 %v654, %v661
          %v670 = vadd.f32 %v655, %v661
          %v671 = vpack.c.bf16 %v664, %v663
          %v672 = vpack.c.bf16 %v666, %v665
          %v673 = vpack.c.bf16 %v668, %v667
          %v674 = vpack.c.bf16 %v670, %v669
          %v679 = vunpack.c.l.b16 %v671
          %v680 = vunpack.c.h.b16 %v671
          %v681 = vunpack.c.l.b16 %v672
          %v682 = vunpack.c.h.b16 %v672
          %v683 = vunpack.c.l.b16 %v673
          %v684 = vunpack.c.h.b16 %v673
          %v685 = vunpack.c.l.b16 %v674
          %v686 = vunpack.c.h.b16 %v674
          %v687 = vpack.c.b16 %v679, %v679
          %v688 = vpack.c.b16 %v680, %v680
          %v689 = vpack.c.b16 %v681, %v681
          %v690 = vpack.c.b16 %v682, %v682
          %v691 = vpack.c.b16 %v683, %v683
          %v692 = vpack.c.b16 %v684, %v684
          %v693 = vpack.c.b16 %v685, %v685
          %v694 = vpack.c.b16 %v686, %v686
          %vm703 = vcmask 257024
          %704 = vst.msk [vmem:[#allocation2] sm:$0xf] %vm703, %v687
          %705 = vst.msk [vmem:[#allocation2 + $0x4] sm:$0xf] %vm703, %v688
          %706 = vst.msk [vmem:[#allocation2 + $0x8] sm:$0xf] %vm703, %v689
          %707 = vst.msk [vmem:[#allocation2 + $0xc] sm:$0xf] %vm703, %v690
          %708 = vst.msk [vmem:[#allocation2 + $0x10] sm:$0xf] %vm703, %v691
          %709 = vst.msk [vmem:[#allocation2 + $0x14] sm:$0xf] %vm703, %v692
          %710 = vst.msk [vmem:[#allocation2 + $0x18] sm:$0xf] %vm703, %v693
          %711 = vst.msk [vmem:[#allocation2 + $0x1c] sm:$0xf] %vm703, %v694
        $region68: #{tpu_custom_call.1} parent=63 // pred_fallthru
          _
        %v712 = vld [vmem:[#allocation2] sm:$0xf]
        %v713 = vld [vmem:[#allocation2 + $0x4] sm:$0xf]
        %v714 = vld [vmem:[#allocation2 + $0x8] sm:$0xf]
        %v715 = vld [vmem:[#allocation2 + $0xc] sm:$0xf]
        %v716 = vld [vmem:[#allocation2 + $0x10] sm:$0xf]
        %v717 = vld [vmem:[#allocation2 + $0x14] sm:$0xf]
        %v718 = vld [vmem:[#allocation2 + $0x18] sm:$0xf]
        %v719 = vld [vmem:[#allocation2 + $0x1c] sm:$0xf]
        %v720 = vld [vmem:[%s497] sm:$0xf]
        %v721 = vld [vmem:[%s497 + $0x4] sm:$0xf]
        %v722 = vld [vmem:[%s497 + $0x8] sm:$0xf]
        %v723 = vld [vmem:[%s497 + $0xc] sm:$0xf]
        %v724 = vld [vmem:[%s510] sm:$0x1]
        %v726 = vlaneseq
        %v727 = vshrl.u32 %v726, 7
        %v728 = vsub.s32 0, %v727
        %v729 = vrot.slane %v724, %v728
        %v739 = vunpack.c.l.b16 %v712
        %v740 = vunpack.c.l.b16 %v713
        %v741 = vunpack.c.l.b16 %v714
        %v742 = vunpack.c.l.b16 %v715
        %v743 = vunpack.c.l.b16 %v716
        %v744 = vunpack.c.l.b16 %v717
        %v745 = vunpack.c.l.b16 %v718
        %v746 = vunpack.c.l.b16 %v719
        %v747 = vpack.c.b16 %v740, %v739
        %v748 = vpack.c.b16 %v742, %v741
        %v749 = vpack.c.b16 %v744, %v743
        %v750 = vpack.c.b16 %v746, %v745
        %v755 = vunpack.c.l.b16 %v720
        %v756 = vunpack.c.l.b16 %v721
        %v757 = vunpack.c.l.b16 %v722
        %v758 = vunpack.c.l.b16 %v723
        %v759 = vpack.c.b16 %v756, %v755
        %v760 = vpack.c.b16 %v758, %v757
        %vm763 = vcmask 261120
        %v765 = vsel %vm763, %v747, 0
        %v768 = vsel %vm763, %v748, 0
        %v771 = vsel %vm763, %v749, 0
        %v774 = vsel %vm763, %v750, 0
        %776 = vmatprep.subr.bf16.mxu0 0
        %777 = vmatpush1.bf16.msra.mxu0 0
        %778 = vmatprep.subr.bf16.mxu0 0
        %779 = vmatpush1.bf16.msra.mxu0 0
        %780 = vmatprep.subr.bf16.mxu0 0
        %781 = vmatpush1.bf16.msra.mxu0 0
        %782 = vmatprep.subr.bf16.mxu0 0
        %783 = vmatpush1.bf16.msra.mxu0 0
        %784 = vmatprep.subr.bf16.mxu0 0
        %785 = vmatpush1.bf16.msra.mxu0 0
        %786 = vmatprep.subr.bf16.mxu0 0
        %787 = vmatpush1.bf16.msra.mxu0 0
        %788 = vmatprep.subr.bf16.mxu0 0
        %789 = vmatpush1.bf16.msra.mxu0 %v760
        %790 = vmatprep.subr.bf16.mxu0 0
        %791 = vmatpush1.bf16.msra.mxu0 %v759
        %792 = vmatprep.subr.bf16.mxu0 0
        %793 = vmatpush2.bf16.msra.mxu0 0
        %794 = vmatprep.subr.bf16.mxu0 0
        %795 = vmatpush2.bf16.msra.mxu0 0
        %796 = vmatprep.subr.bf16.mxu0 0
        %797 = vmatpush2.bf16.msra.mxu0 0
        %798 = vmatprep.subr.bf16.mxu0 0
        %799 = vmatpush2.bf16.msra.mxu0 0
        %800 = vmatprep.subr.bf16.mxu0 0
        %801 = vmatpush2.bf16.msra.mxu0 0
        %802 = vmatprep.subr.bf16.mxu0 0
        %803 = vmatpush2.bf16.msra.mxu0 0
        %804 = vmatprep.subr.bf16.mxu0 0
        %805 = vmatpush2.bf16.msra.mxu0 0
        %806 = vmatprep.subr.bf16.mxu0 0
        %807 = vmatpush2.bf16.msra.mxu0 0
        %808 = vmatprep.mubr.bf16.mxu0 0
        %809 = vmatmul.mubr.bf16.gmra.mxu0 %v765
        %v810 = vpop.f32.mrf.mxu0
        %v811 = vadd.f32 %v729, %v810
        %v812 = vpop.f32.mrf.mxu0
        %v813 = vpop.f32.mrf.mxu0
        %v814 = vadd.f32 %v729, %v813
        %v815 = vpop.f32.mrf.mxu0
        %816 = vmatprep.mubr.bf16.mxu0 0
        %817 = vmatmul.mubr.bf16.gmra.mxu0 %v768
        %v818 = vpop.f32.mrf.mxu0
        %v819 = vadd.f32 %v729, %v818
        %v820 = vpop.f32.mrf.mxu0
        %v821 = vpop.f32.mrf.mxu0
        %v822 = vadd.f32 %v729, %v821
        %v823 = vpop.f32.mrf.mxu0
        %824 = vmatprep.mubr.bf16.mxu0 0
        %825 = vmatmul.mubr.bf16.gmra.mxu0 %v771
        %v826 = vpop.f32.mrf.mxu0
        %v827 = vadd.f32 %v729, %v826
        %v828 = vpop.f32.mrf.mxu0
        %v829 = vpop.f32.mrf.mxu0
        %v830 = vadd.f32 %v729, %v829
        %v831 = vpop.f32.mrf.mxu0
        %832 = vmatprep.mubr.bf16.mxu0 0
        %833 = vmatmul.mubr.bf16.gmra.mxu0 %v774
        %v834 = vpop.f32.mrf.mxu0
        %v835 = vadd.f32 %v729, %v834
        %v836 = vpop.f32.mrf.mxu0
        %v837 = vpop.f32.mrf.mxu0
        %v838 = vadd.f32 %v729, %v837
        %v839 = vpop.f32.mrf.mxu0
        %840 = vdwg.mxu0
        %v841 = vpack.c.bf16 %v814, %v811
        %v842 = vpack.c.bf16 %v822, %v819
        %v843 = vpack.c.bf16 %v830, %v827
        %v844 = vpack.c.bf16 %v838, %v835
        %v845 = vld [vmem:[%s502] sm:$0xf]
        %v846 = vld [vmem:[%s502 + $0x4] sm:$0xf]
        %v847 = vld [vmem:[%s502 + $0x8] sm:$0xf]
        %v848 = vld [vmem:[%s502 + $0xc] sm:$0xf]
        %v849 = vld [vmem:[%s513] sm:$0x1]
        %v851 = vlaneseq
        %v852 = vshrl.u32 %v851, 7
        %v853 = vsub.s32 0, %v852
        %v854 = vrot.slane %v849, %v853
        %v860 = vunpack.c.l.b16 %v845
        %v861 = vunpack.c.l.b16 %v846
        %v862 = vunpack.c.l.b16 %v847
        %v863 = vunpack.c.l.b16 %v848
        %v864 = vpack.c.b16 %v861, %v860
        %v865 = vpack.c.b16 %v863, %v862
        %868 = vmatprep.subr.bf16.mxu0 0
        %869 = vmatpush1.bf16.msra.mxu0 0
        %870 = vmatprep.subr.bf16.mxu0 0
        %871 = vmatpush1.bf16.msra.mxu0 0
        %872 = vmatprep.subr.bf16.mxu0 0
        %873 = vmatpush1.bf16.msra.mxu0 0
        %874 = vmatprep.subr.bf16.mxu0 0
        %875 = vmatpush1.bf16.msra.mxu0 0
        %876 = vmatprep.subr.bf16.mxu0 0
        %877 = vmatpush1.bf16.msra.mxu0 0
        %878 = vmatprep.subr.bf16.mxu0 0
        %879 = vmatpush1.bf16.msra.mxu0 0
        %880 = vmatprep.subr.bf16.mxu0 0
        %881 = vmatpush1.bf16.msra.mxu0 %v865
        %882 = vmatprep.subr.bf16.mxu0 0
        %883 = vmatpush1.bf16.msra.mxu0 %v864
        %884 = vmatprep.subr.bf16.mxu0 0
        %885 = vmatpush2.bf16.msra.mxu0 0
        %886 = vmatprep.subr.bf16.mxu0 0
        %887 = vmatpush2.bf16.msra.mxu0 0
        %888 = vmatprep.subr.bf16.mxu0 0
        %889 = vmatpush2.bf16.msra.mxu0 0
        %890 = vmatprep.subr.bf16.mxu0 0
        %891 = vmatpush2.bf16.msra.mxu0 0
        %892 = vmatprep.subr.bf16.mxu0 0
        %893 = vmatpush2.bf16.msra.mxu0 0
        %894 = vmatprep.subr.bf16.mxu0 0
        %895 = vmatpush2.bf16.msra.mxu0 0
        %896 = vmatprep.subr.bf16.mxu0 0
        %897 = vmatpush2.bf16.msra.mxu0 0
        %898 = vmatprep.subr.bf16.mxu0 0
        %899 = vmatpush2.bf16.msra.mxu0 0
        %900 = vmatprep.mubr.bf16.mxu0 0
        %901 = vmatmul.mubr.bf16.gmra.mxu0 %v765
        %v902 = vpop.f32.mrf.mxu0
        %v903 = vadd.f32 %v854, %v902
        %v904 = vpop.f32.mrf.mxu0
        %v905 = vpop.f32.mrf.mxu0
        %v906 = vadd.f32 %v854, %v905
        %v907 = vpop.f32.mrf.mxu0
        %908 = vmatprep.mubr.bf16.mxu0 0
        %909 = vmatmul.mubr.bf16.gmra.mxu0 %v768
        %v910 = vpop.f32.mrf.mxu0
        %v911 = vadd.f32 %v854, %v910
        %v912 = vpop.f32.mrf.mxu0
        %v913 = vpop.f32.mrf.mxu0
        %v914 = vadd.f32 %v854, %v913
        %v915 = vpop.f32.mrf.mxu0
        %916 = vmatprep.mubr.bf16.mxu0 0
        %917 = vmatmul.mubr.bf16.gmra.mxu0 %v771
        %v918 = vpop.f32.mrf.mxu0
        %v919 = vadd.f32 %v854, %v918
        %v920 = vpop.f32.mrf.mxu0
        %v921 = vpop.f32.mrf.mxu0
        %v922 = vadd.f32 %v854, %v921
        %v923 = vpop.f32.mrf.mxu0
        %924 = vmatprep.mubr.bf16.mxu0 0
        %925 = vmatmul.mubr.bf16.gmra.mxu0 %v774
        %v926 = vpop.f32.mrf.mxu0
        %v927 = vadd.f32 %v854, %v926
        %v928 = vpop.f32.mrf.mxu0
        %v929 = vpop.f32.mrf.mxu0
        %v930 = vadd.f32 %v854, %v929
        %v931 = vpop.f32.mrf.mxu0
        %932 = vdwg.mxu0
        %v933 = vpack.c.bf16 %v906, %v903
        %v934 = vpack.c.bf16 %v914, %v911
        %v935 = vpack.c.bf16 %v922, %v919
        %v936 = vpack.c.bf16 %v930, %v927
        %v937 = vld [vmem:[%s507] sm:$0xf]
        %v938 = vld [vmem:[%s507 + $0x4] sm:$0xf]
        %v939 = vld [vmem:[%s507 + $0x8] sm:$0xf]
        %v940 = vld [vmem:[%s507 + $0xc] sm:$0xf]
        %v941 = vld [vmem:[%s516] sm:$0x1]
        %v943 = vlaneseq
        %v944 = vshrl.u32 %v943, 7
        %v945 = vsub.s32 0, %v944
        %v946 = vrot.slane %v941, %v945
        %v952 = vunpack.c.l.b16 %v937
        %v953 = vunpack.c.l.b16 %v938
        %v954 = vunpack.c.l.b16 %v939
        %v955 = vunpack.c.l.b16 %v940
        %v956 = vpack.c.b16 %v953, %v952
        %v957 = vpack.c.b16 %v955, %v954
        %960 = vmatprep.subr.bf16.mxu0 0
        %961 = vmatpush1.bf16.msra.mxu0 0
        %962 = vmatprep.subr.bf16.mxu0 0
        %963 = vmatpush1.bf16.msra.mxu0 0
        %964 = vmatprep.subr.bf16.mxu0 0
        %965 = vmatpush1.bf16.msra.mxu0 0
        %966 = vmatprep.subr.bf16.mxu0 0
        %967 = vmatpush1.bf16.msra.mxu0 0
        %968 = vmatprep.subr.bf16.mxu0 0
        %969 = vmatpush1.bf16.msra.mxu0 0
        %970 = vmatprep.subr.bf16.mxu0 0
        %971 = vmatpush1.bf16.msra.mxu0 0
        %972 = vmatprep.subr.bf16.mxu0 0
        %973 = vmatpush1.bf16.msra.mxu0 %v957
        %974 = vmatprep.subr.bf16.mxu0 0
        %975 = vmatpush1.bf16.msra.mxu0 %v956
        %976 = vmatprep.subr.bf16.mxu0 0
        %977 = vmatpush2.bf16.msra.mxu0 0
        %978 = vmatprep.subr.bf16.mxu0 0
        %979 = vmatpush2.bf16.msra.mxu0 0
        %980 = vmatprep.subr.bf16.mxu0 0
        %981 = vmatpush2.bf16.msra.mxu0 0
        %982 = vmatprep.subr.bf16.mxu0 0
        %983 = vmatpush2.bf16.msra.mxu0 0
        %984 = vmatprep.subr.bf16.mxu0 0
        %985 = vmatpush2.bf16.msra.mxu0 0
        %986 = vmatprep.subr.bf16.mxu0 0
        %987 = vmatpush2.bf16.msra.mxu0 0
        %988 = vmatprep.subr.bf16.mxu0 0
        %989 = vmatpush2.bf16.msra.mxu0 0
        %990 = vmatprep.subr.bf16.mxu0 0
        %991 = vmatpush2.bf16.msra.mxu0 0
        %992 = vmatprep.mubr.bf16.mxu0 0
        %993 = vmatmul.mubr.bf16.gmra.mxu0 %v765
        %v994 = vpop.f32.mrf.mxu0
        %v995 = vadd.f32 %v946, %v994
        %v996 = vpop.f32.mrf.mxu0
        %v997 = vpop.f32.mrf.mxu0
        %v998 = vadd.f32 %v946, %v997
        %v999 = vpop.f32.mrf.mxu0
        %1000 = vmatprep.mubr.bf16.mxu0 0
        %1001 = vmatmul.mubr.bf16.gmra.mxu0 %v768
        %v1002 = vpop.f32.mrf.mxu0
        %v1003 = vadd.f32 %v946, %v1002
        %v1004 = vpop.f32.mrf.mxu0
        %v1005 = vpop.f32.mrf.mxu0
        %v1006 = vadd.f32 %v946, %v1005
        %v1007 = vpop.f32.mrf.mxu0
        %1008 = vmatprep.mubr.bf16.mxu0 0
        %1009 = vmatmul.mubr.bf16.gmra.mxu0 %v771
        %v1010 = vpop.f32.mrf.mxu0
        %v1011 = vadd.f32 %v946, %v1010
        %v1012 = vpop.f32.mrf.mxu0
        %v1013 = vpop.f32.mrf.mxu0
        %v1014 = vadd.f32 %v946, %v1013
        %v1015 = vpop.f32.mrf.mxu0
        %1016 = vmatprep.mubr.bf16.mxu0 0
        %1017 = vmatmul.mubr.bf16.gmra.mxu0 %v774
        %v1018 = vpop.f32.mrf.mxu0
        %v1019 = vadd.f32 %v946, %v1018
        %v1020 = vpop.f32.mrf.mxu0
        %v1021 = vpop.f32.mrf.mxu0
        %v1022 = vadd.f32 %v946, %v1021
        %v1023 = vpop.f32.mrf.mxu0
        %1024 = vdwg.mxu0
        %v1025 = vpack.c.bf16 %v998, %v995
        %v1026 = vpack.c.bf16 %v1006, %v1003
        %v1027 = vpack.c.bf16 %v1014, %v1011
        %v1028 = vpack.c.bf16 %v1022, %v1019
        %vm1029 = vcmask 64512
        %v1031 = vsel %vm1029, %v841, 0
        %v1034 = vsel %vm1029, %v933, 0
        %1036 = vmatprep.subr.bf16.mxu0 0
        %1037 = vmatpush1.bf16.xpose.msra.mxu0 0
        %1038 = vmatprep.subr.bf16.mxu0 0
        %1039 = vmatpush1.bf16.xpose.msra.mxu0 0
        %1040 = vmatprep.subr.bf16.mxu0 0
        %1041 = vmatpush1.bf16.xpose.msra.mxu0 0
        %1042 = vmatprep.subr.bf16.mxu0 0
        %1043 = vmatpush1.bf16.xpose.msra.mxu0 0
        %1044 = vmatprep.subr.bf16.mxu0 0
        %1045 = vmatpush1.bf16.xpose.msra.mxu0 0
        %1046 = vmatprep.subr.bf16.mxu0 0
        %1047 = vmatpush1.bf16.xpose.msra.mxu0 0
        %1048 = vmatprep.subr.bf16.mxu0 0
        %1049 = vmatpush1.bf16.xpose.msra.mxu0 0
        %1050 = vmatprep.subr.bf16.mxu0 0
        %1051 = vmatpush1.bf16.xpose.msra.mxu0 %v1034
        %1052 = vmatprep.subr.bf16.mxu0 0
        %1053 = vmatpush2.bf16.xpose.msra.mxu0 0
        %1054 = vmatprep.subr.bf16.mxu0 0
        %1055 = vmatpush2.bf16.xpose.msra.mxu0 0
        %1056 = vmatprep.subr.bf16.mxu0 0
        %1057 = vmatpush2.bf16.xpose.msra.mxu0 0
        %1058 = vmatprep.subr.bf16.mxu0 0
        %1059 = vmatpush2.bf16.xpose.msra.mxu0 0
        %1060 = vmatprep.subr.bf16.mxu0 0
        %1061 = vmatpush2.bf16.xpose.msra.mxu0 0
        %1062 = vmatprep.subr.bf16.mxu0 0
        %1063 = vmatpush2.bf16.xpose.msra.mxu0 0
        %1064 = vmatprep.subr.bf16.mxu0 0
        %1065 = vmatpush2.bf16.xpose.msra.mxu0 0
        %1066 = vmatprep.subr.bf16.mxu0 0
        %1067 = vmatpush2.bf16.xpose.msra.mxu0 0
        %1068 = vmatprep.mubr.bf16.mxu0 0
        %1069 = vmatmul.mubr.bf16.gmra.mxu0 %v1031
        %v1070 = vpop.f32.mrf.mxu0
        %v1071 = vadd.f32 0.0, %v1070
        %v1072 = vpop.f32.mrf.mxu0
        %v1073 = vpop.f32.mrf.mxu0
        %v1074 = vadd.f32 0.0, %v1073
        %v1075 = vpop.f32.mrf.mxu0
        %1076 = vdwg.mxu0
        %v1078 = vsel %vm1029, %v842, 0
        %v1081 = vsel %vm1029, %v934, 0
        %1083 = vmatprep.subr.bf16.mxu0 0
        %1084 = vmatpush1.bf16.xpose.msra.mxu0 0
        %1085 = vmatprep.subr.bf16.mxu0 0
        %1086 = vmatpush1.bf16.xpose.msra.mxu0 0
        %1087 = vmatprep.subr.bf16.mxu0 0
        %1088 = vmatpush1.bf16.xpose.msra.mxu0 0
        %1089 = vmatprep.subr.bf16.mxu0 0
        %1090 = vmatpush1.bf16.xpose.msra.mxu0 0
        %1091 = vmatprep.subr.bf16.mxu0 0
        %1092 = vmatpush1.bf16.xpose.msra.mxu0 0
        %1093 = vmatprep.subr.bf16.mxu0 0
        %1094 = vmatpush1.bf16.xpose.msra.mxu0 0
        %1095 = vmatprep.subr.bf16.mxu0 0
        %1096 = vmatpush1.bf16.xpose.msra.mxu0 0
        %1097 = vmatprep.subr.bf16.mxu0 0
        %1098 = vmatpush1.bf16.xpose.msra.mxu0 %v1081
        %1099 = vmatprep.subr.bf16.mxu0 0
        %1100 = vmatpush2.bf16.xpose.msra.mxu0 0
        %1101 = vmatprep.subr.bf16.mxu0 0
        %1102 = vmatpush2.bf16.xpose.msra.mxu0 0
        %1103 = vmatprep.subr.bf16.mxu0 0
        %1104 = vmatpush2.bf16.xpose.msra.mxu0 0
        %1105 = vmatprep.subr.bf16.mxu0 0
        %1106 = vmatpush2.bf16.xpose.msra.mxu0 0
        %1107 = vmatprep.subr.bf16.mxu0 0
        %1108 = vmatpush2.bf16.xpose.msra.mxu0 0
        %1109 = vmatprep.subr.bf16.mxu0 0
        %1110 = vmatpush2.bf16.xpose.msra.mxu0 0
        %1111 = vmatprep.subr.bf16.mxu0 0
        %1112 = vmatpush2.bf16.xpose.msra.mxu0 0
        %1113 = vmatprep.subr.bf16.mxu0 0
        %1114 = vmatpush2.bf16.xpose.msra.mxu0 0
        %1115 = vmatprep.mubr.bf16.mxu0 0
        %1116 = vmatmul.mubr.bf16.gmra.mxu0 %v1078
        %v1117 = vpop.f32.mrf.mxu0
        %v1118 = vadd.f32 0.0, %v1117
        %v1119 = vpop.f32.mrf.mxu0
        %v1120 = vpop.f32.mrf.mxu0
        %v1121 = vadd.f32 0.0, %v1120
        %v1122 = vpop.f32.mrf.mxu0
        %1123 = vdwg.mxu0
        %v1125 = vsel %vm1029, %v843, 0
        %v1128 = vsel %vm1029, %v935, 0
        %1130 = vmatprep.subr.bf16.mxu0 0
        %1131 = vmatpush1.bf16.xpose.msra.mxu0 0
        %1132 = vmatprep.subr.bf16.mxu0 0
        %1133 = vmatpush1.bf16.xpose.msra.mxu0 0
        %1134 = vmatprep.subr.bf16.mxu0 0
        %1135 = vmatpush1.bf16.xpose.msra.mxu0 0
        %1136 = vmatprep.subr.bf16.mxu0 0
        %1137 = vmatpush1.bf16.xpose.msra.mxu0 0
        %1138 = vmatprep.subr.bf16.mxu0 0
        %1139 = vmatpush1.bf16.xpose.msra.mxu0 0
        %1140 = vmatprep.subr.bf16.mxu0 0
        %1141 = vmatpush1.bf16.xpose.msra.mxu0 0
        %1142 = vmatprep.subr.bf16.mxu0 0
        %1143 = vmatpush1.bf16.xpose.msra.mxu0 0
        %1144 = vmatprep.subr.bf16.mxu0 0
        %1145 = vmatpush1.bf16.xpose.msra.mxu0 %v1128
        %1146 = vmatprep.subr.bf16.mxu0 0
        %1147 = vmatpush2.bf16.xpose.msra.mxu0 0
        %1148 = vmatprep.subr.bf16.mxu0 0
        %1149 = vmatpush2.bf16.xpose.msra.mxu0 0
        %1150 = vmatprep.subr.bf16.mxu0 0
        %1151 = vmatpush2.bf16.xpose.msra.mxu0 0
        %1152 = vmatprep.subr.bf16.mxu0 0
        %1153 = vmatpush2.bf16.xpose.msra.mxu0 0
        %1154 = vmatprep.subr.bf16.mxu0 0
        %1155 = vmatpush2.bf16.xpose.msra.mxu0 0
        %1156 = vmatprep.subr.bf16.mxu0 0
        %1157 = vmatpush2.bf16.xpose.msra.mxu0 0
        %1158 = vmatprep.subr.bf16.mxu0 0
        %1159 = vmatpush2.bf16.xpose.msra.mxu0 0
        %1160 = vmatprep.subr.bf16.mxu0 0
        %1161 = vmatpush2.bf16.xpose.msra.mxu0 0
        %1162 = vmatprep.mubr.bf16.mxu0 0
        %1163 = vmatmul.mubr.bf16.gmra.mxu0 %v1125
        %v1164 = vpop.f32.mrf.mxu0
        %v1165 = vadd.f32 0.0, %v1164
        %v1166 = vpop.f32.mrf.mxu0
        %v1167 = vpop.f32.mrf.mxu0
        %v1168 = vadd.f32 0.0, %v1167
        %v1169 = vpop.f32.mrf.mxu0
        %1170 = vdwg.mxu0
        %v1172 = vsel %vm1029, %v844, 0
        %v1175 = vsel %vm1029, %v936, 0
        %1177 = vmatprep.subr.bf16.mxu0 0
        %1178 = vmatpush1.bf16.xpose.msra.mxu0 0
        %1179 = vmatprep.subr.bf16.mxu0 0
        %1180 = vmatpush1.bf16.xpose.msra.mxu0 0
        %1181 = vmatprep.subr.bf16.mxu0 0
        %1182 = vmatpush1.bf16.xpose.msra.mxu0 0
        %1183 = vmatprep.subr.bf16.mxu0 0
        %1184 = vmatpush1.bf16.xpose.msra.mxu0 0
        %1185 = vmatprep.subr.bf16.mxu0 0
        %1186 = vmatpush1.bf16.xpose.msra.mxu0 0
        %1187 = vmatprep.subr.bf16.mxu0 0
        %1188 = vmatpush1.bf16.xpose.msra.mxu0 0
        %1189 = vmatprep.subr.bf16.mxu0 0
        %1190 = vmatpush1.bf16.xpose.msra.mxu0 0
        %1191 = vmatprep.subr.bf16.mxu0 0
        %1192 = vmatpush1.bf16.xpose.msra.mxu0 %v1175
        %1193 = vmatprep.subr.bf16.mxu0 0
        %1194 = vmatpush2.bf16.xpose.msra.mxu0 0
        %1195 = vmatprep.subr.bf16.mxu0 0
        %1196 = vmatpush2.bf16.xpose.msra.mxu0 0
        %1197 = vmatprep.subr.bf16.mxu0 0
        %1198 = vmatpush2.bf16.xpose.msra.mxu0 0
        %1199 = vmatprep.subr.bf16.mxu0 0
        %1200 = vmatpush2.bf16.xpose.msra.mxu0 0
        %1201 = vmatprep.subr.bf16.mxu0 0
        %1202 = vmatpush2.bf16.xpose.msra.mxu0 0
        %1203 = vmatprep.subr.bf16.mxu0 0
        %1204 = vmatpush2.bf16.xpose.msra.mxu0 0
        %1205 = vmatprep.subr.bf16.mxu0 0
        %1206 = vmatpush2.bf16.xpose.msra.mxu0 0
        %1207 = vmatprep.subr.bf16.mxu0 0
        %1208 = vmatpush2.bf16.xpose.msra.mxu0 0
        %1209 = vmatprep.mubr.bf16.mxu0 0
        %1210 = vmatmul.mubr.bf16.gmra.mxu0 %v1172
        %v1211 = vpop.f32.mrf.mxu0
        %v1212 = vadd.f32 0.0, %v1211
        %v1213 = vpop.f32.mrf.mxu0
        %v1214 = vpop.f32.mrf.mxu0
        %v1215 = vadd.f32 0.0, %v1214
        %v1216 = vpop.f32.mrf.mxu0
        %1217 = vdwg.mxu0
        %vm1218 = vcmask 130048
        %v1219 = vsel %vm1218, %v1071, -inf
        %1220 = vmax.xlane.f32.xlu0 %v1219
        %v1221 = vpop.xlane.xlu0 %1220
        %v1222 = vsel %vm1218, %v1074, -inf
        %1223 = vmax.xlane.f32.xlu0 %v1222
        %v1224 = vpop.xlane.xlu0 %1223
        %v1225 = vsel %vm1218, %v1118, -inf
        %1226 = vmax.xlane.f32.xlu0 %v1225
        %v1227 = vpop.xlane.xlu0 %1226
        %v1228 = vsel %vm1218, %v1121, -inf
        %1229 = vmax.xlane.f32.xlu0 %v1228
        %v1230 = vpop.xlane.xlu0 %1229
        %v1231 = vsel %vm1218, %v1165, -inf
        %1232 = vmax.xlane.f32.xlu0 %v1231
        %v1233 = vpop.xlane.xlu0 %1232
        %v1234 = vsel %vm1218, %v1168, -inf
        %1235 = vmax.xlane.f32.xlu0 %v1234
        %v1236 = vpop.xlane.xlu0 %1235
        %v1237 = vsel %vm1218, %v1212, -inf
        %1238 = vmax.xlane.f32.xlu0 %v1237
        %v1239 = vpop.xlane.xlu0 %1238
        %v1240 = vsel %vm1218, %v1215, -inf
        %1241 = vmax.xlane.f32.xlu0 %v1240
        %v1242 = vpop.xlane.xlu0 %1241
        %v1243 = vsub.f32 %v1071, %v1221
        %v1244 = vsub.f32 %v1074, %v1224
        %v1245 = vsub.f32 %v1118, %v1227
        %v1246 = vsub.f32 %v1121, %v1230
        %v1247 = vsub.f32 %v1165, %v1233
        %v1248 = vsub.f32 %v1168, %v1236
        %v1249 = vsub.f32 %v1212, %v1239
        %v1250 = vsub.f32 %v1215, %v1242
        %v1251 = vmul.f32 %v1243, 1.442695
        %v1252 = vpow.pop %v1251
        %v1253 = vmul.f32 %v1244, 1.442695
        %v1254 = vpow.pop %v1253
        %v1255 = vmul.f32 %v1245, 1.442695
        %v1256 = vpow.pop %v1255
        %v1257 = vmul.f32 %v1246, 1.442695
        %v1258 = vpow.pop %v1257
        %v1259 = vmul.f32 %v1247, 1.442695
        %v1260 = vpow.pop %v1259
        %v1261 = vmul.f32 %v1248, 1.442695
        %v1262 = vpow.pop %v1261
        %v1263 = vmul.f32 %v1249, 1.442695
        %v1264 = vpow.pop %v1263
        %v1265 = vmul.f32 %v1250, 1.442695
        %v1266 = vpow.pop %v1265
        %v1267 = vsel %vm1218, %v1252, 0.0
        %1268 = vadd.xlane.f32.xlu0 %v1267
        %v1269 = vpop.xlane.xlu0 %1268
        %v1270 = vsel %vm1218, %v1254, 0.0
        %1271 = vadd.xlane.f32.xlu0 %v1270
        %v1272 = vpop.xlane.xlu0 %1271
        %v1273 = vsel %vm1218, %v1256, 0.0
        %1274 = vadd.xlane.f32.xlu0 %v1273
        %v1275 = vpop.xlane.xlu0 %1274
        %v1276 = vsel %vm1218, %v1258, 0.0
        %1277 = vadd.xlane.f32.xlu0 %v1276
        %v1278 = vpop.xlane.xlu0 %1277
        %v1279 = vsel %vm1218, %v1260, 0.0
        %1280 = vadd.xlane.f32.xlu0 %v1279
        %v1281 = vpop.xlane.xlu0 %1280
        %v1282 = vsel %vm1218, %v1262, 0.0
        %1283 = vadd.xlane.f32.xlu0 %v1282
        %v1284 = vpop.xlane.xlu0 %1283
        %v1285 = vsel %vm1218, %v1264, 0.0
        %1286 = vadd.xlane.f32.xlu0 %v1285
        %v1287 = vpop.xlane.xlu0 %1286
        %v1288 = vsel %vm1218, %v1266, 0.0
        %1289 = vadd.xlane.f32.xlu0 %v1288
        %v1290 = vpop.xlane.xlu0 %1289
        %v1291 = vrcp.pop %v1269
        %v1292 = vrcp.pop %v1272
        %v1293 = vrcp.pop %v1275
        %v1294 = vrcp.pop %v1278
        %v1295 = vrcp.pop %v1281
        %v1296 = vrcp.pop %v1284
        %v1297 = vrcp.pop %v1287
        %v1298 = vrcp.pop %v1290
        %v1299 = vmul.f32 %v1252, %v1291
        %v1300 = vmul.f32 %v1254, %v1292
        %v1301 = vmul.f32 %v1256, %v1293
        %v1302 = vmul.f32 %v1258, %v1294
        %v1303 = vmul.f32 %v1260, %v1295
        %v1304 = vmul.f32 %v1262, %v1296
        %v1305 = vmul.f32 %v1264, %v1297
        %v1306 = vmul.f32 %v1266, %v1298
        %v1307 = vpack.c.bf16 %v1300, %v1299
        %v1308 = vpack.c.bf16 %v1302, %v1301
        %v1309 = vpack.c.bf16 %v1304, %v1303
        %v1310 = vpack.c.bf16 %v1306, %v1305
        %v1312 = vsel %vm1218, %v1307, 0
        %1314 = vmatprep.subr.bf16.mxu0 0
        %1315 = vmatpush1.bf16.msra.mxu0 0
        %1316 = vmatprep.subr.bf16.mxu0 0
        %1317 = vmatpush1.bf16.msra.mxu0 0
        %1318 = vmatprep.subr.bf16.mxu0 0
        %1319 = vmatpush1.bf16.msra.mxu0 0
        %1320 = vmatprep.subr.bf16.mxu0 0
        %1321 = vmatpush1.bf16.msra.mxu0 0
        %1322 = vmatprep.subr.bf16.mxu0 0
        %1323 = vmatpush1.bf16.msra.mxu0 0
        %1324 = vmatprep.subr.bf16.mxu0 0
        %1325 = vmatpush1.bf16.msra.mxu0 0
        %1326 = vmatprep.subr.bf16.mxu0 0
        %1327 = vmatpush1.bf16.msra.mxu0 0
        %1328 = vmatprep.subr.bf16.mxu0 0
        %1329 = vmatpush1.bf16.msra.mxu0 %v1025
        %1330 = vmatprep.subr.bf16.mxu0 0
        %1331 = vmatpush2.bf16.msra.mxu0 0
        %1332 = vmatprep.subr.bf16.mxu0 0
        %1333 = vmatpush2.bf16.msra.mxu0 0
        %1334 = vmatprep.subr.bf16.mxu0 0
        %1335 = vmatpush2.bf16.msra.mxu0 0
        %1336 = vmatprep.subr.bf16.mxu0 0
        %1337 = vmatpush2.bf16.msra.mxu0 0
        %1338 = vmatprep.subr.bf16.mxu0 0
        %1339 = vmatpush2.bf16.msra.mxu0 0
        %1340 = vmatprep.subr.bf16.mxu0 0
        %1341 = vmatpush2.bf16.msra.mxu0 0
        %1342 = vmatprep.subr.bf16.mxu0 0
        %1343 = vmatpush2.bf16.msra.mxu0 0
        %1344 = vmatprep.subr.bf16.mxu0 0
        %1345 = vmatpush2.bf16.msra.mxu0 0
        %1346 = vmatprep.mubr.bf16.mxu0 0
        %1347 = vmatmul.mubr.bf16.gmra.mxu0 %v1312
        %v1348 = vpop.f32.mrf.mxu0
        %v1349 = vadd.f32 0.0, %v1348
        %v1350 = vpop.f32.mrf.mxu0
        %v1351 = vpop.f32.mrf.mxu0
        %v1352 = vadd.f32 0.0, %v1351
        %v1353 = vpop.f32.mrf.mxu0
        %1354 = vdwg.mxu0
        %v1356 = vsel %vm1218, %v1308, 0
        %1358 = vmatprep.subr.bf16.mxu0 0
        %1359 = vmatpush1.bf16.msra.mxu0 0
        %1360 = vmatprep.subr.bf16.mxu0 0
        %1361 = vmatpush1.bf16.msra.mxu0 0
        %1362 = vmatprep.subr.bf16.mxu0 0
        %1363 = vmatpush1.bf16.msra.mxu0 0
        %1364 = vmatprep.subr.bf16.mxu0 0
        %1365 = vmatpush1.bf16.msra.mxu0 0
        %1366 = vmatprep.subr.bf16.mxu0 0
        %1367 = vmatpush1.bf16.msra.mxu0 0
        %1368 = vmatprep.subr.bf16.mxu0 0
        %1369 = vmatpush1.bf16.msra.mxu0 0
        %1370 = vmatprep.subr.bf16.mxu0 0
        %1371 = vmatpush1.bf16.msra.mxu0 0
        %1372 = vmatprep.subr.bf16.mxu0 0
        %1373 = vmatpush1.bf16.msra.mxu0 %v1026
        %1374 = vmatprep.subr.bf16.mxu0 0
        %1375 = vmatpush2.bf16.msra.mxu0 0
        %1376 = vmatprep.subr.bf16.mxu0 0
        %1377 = vmatpush2.bf16.msra.mxu0 0
        %1378 = vmatprep.subr.bf16.mxu0 0
        %1379 = vmatpush2.bf16.msra.mxu0 0
        %1380 = vmatprep.subr.bf16.mxu0 0
        %1381 = vmatpush2.bf16.msra.mxu0 0
        %1382 = vmatprep.subr.bf16.mxu0 0
        %1383 = vmatpush2.bf16.msra.mxu0 0
        %1384 = vmatprep.subr.bf16.mxu0 0
        %1385 = vmatpush2.bf16.msra.mxu0 0
        %1386 = vmatprep.subr.bf16.mxu0 0
        %1387 = vmatpush2.bf16.msra.mxu0 0
        %1388 = vmatprep.subr.bf16.mxu0 0
        %1389 = vmatpush2.bf16.msra.mxu0 0
        %1390 = vmatprep.mubr.bf16.mxu0 0
        %1391 = vmatmul.mubr.bf16.gmra.mxu0 %v1356
        %v1392 = vpop.f32.mrf.mxu0
        %v1393 = vadd.f32 0.0, %v1392
        %v1394 = vpop.f32.mrf.mxu0
        %v1395 = vpop.f32.mrf.mxu0
        %v1396 = vadd.f32 0.0, %v1395
        %v1397 = vpop.f32.mrf.mxu0
        %1398 = vdwg.mxu0
        %v1400 = vsel %vm1218, %v1309, 0
        %1402 = vmatprep.subr.bf16.mxu0 0
        %1403 = vmatpush1.bf16.msra.mxu0 0
        %1404 = vmatprep.subr.bf16.mxu0 0
        %1405 = vmatpush1.bf16.msra.mxu0 0
        %1406 = vmatprep.subr.bf16.mxu0 0
        %1407 = vmatpush1.bf16.msra.mxu0 0
        %1408 = vmatprep.subr.bf16.mxu0 0
        %1409 = vmatpush1.bf16.msra.mxu0 0
        %1410 = vmatprep.subr.bf16.mxu0 0
        %1411 = vmatpush1.bf16.msra.mxu0 0
        %1412 = vmatprep.subr.bf16.mxu0 0
        %1413 = vmatpush1.bf16.msra.mxu0 0
        %1414 = vmatprep.subr.bf16.mxu0 0
        %1415 = vmatpush1.bf16.msra.mxu0 0
        %1416 = vmatprep.subr.bf16.mxu0 0
        %1417 = vmatpush1.bf16.msra.mxu0 %v1027
        %1418 = vmatprep.subr.bf16.mxu0 0
        %1419 = vmatpush2.bf16.msra.mxu0 0
        %1420 = vmatprep.subr.bf16.mxu0 0
        %1421 = vmatpush2.bf16.msra.mxu0 0
        %1422 = vmatprep.subr.bf16.mxu0 0
        %1423 = vmatpush2.bf16.msra.mxu0 0
        %1424 = vmatprep.subr.bf16.mxu0 0
        %1425 = vmatpush2.bf16.msra.mxu0 0
        %1426 = vmatprep.subr.bf16.mxu0 0
        %1427 = vmatpush2.bf16.msra.mxu0 0
        %1428 = vmatprep.subr.bf16.mxu0 0
        %1429 = vmatpush2.bf16.msra.mxu0 0
        %1430 = vmatprep.subr.bf16.mxu0 0
        %1431 = vmatpush2.bf16.msra.mxu0 0
        %1432 = vmatprep.subr.bf16.mxu0 0
        %1433 = vmatpush2.bf16.msra.mxu0 0
        %1434 = vmatprep.mubr.bf16.mxu0 0
        %1435 = vmatmul.mubr.bf16.gmra.mxu0 %v1400
        %v1436 = vpop.f32.mrf.mxu0
        %v1437 = vadd.f32 0.0, %v1436
        %v1438 = vpop.f32.mrf.mxu0
        %v1439 = vpop.f32.mrf.mxu0
        %v1440 = vadd.f32 0.0, %v1439
        %v1441 = vpop.f32.mrf.mxu0
        %1442 = vdwg.mxu0
        %v1444 = vsel %vm1218, %v1310, 0
        %1446 = vmatprep.subr.bf16.mxu0 0
        %1447 = vmatpush1.bf16.msra.mxu0 0
        %1448 = vmatprep.subr.bf16.mxu0 0
        %1449 = vmatpush1.bf16.msra.mxu0 0
        %1450 = vmatprep.subr.bf16.mxu0 0
        %1451 = vmatpush1.bf16.msra.mxu0 0
        %1452 = vmatprep.subr.bf16.mxu0 0
        %1453 = vmatpush1.bf16.msra.mxu0 0
        %1454 = vmatprep.subr.bf16.mxu0 0
        %1455 = vmatpush1.bf16.msra.mxu0 0
        %1456 = vmatprep.subr.bf16.mxu0 0
        %1457 = vmatpush1.bf16.msra.mxu0 0
        %1458 = vmatprep.subr.bf16.mxu0 0
        %1459 = vmatpush1.bf16.msra.mxu0 0
        %1460 = vmatprep.subr.bf16.mxu0 0
        %1461 = vmatpush1.bf16.msra.mxu0 %v1028
        %1462 = vmatprep.subr.bf16.mxu0 0
        %1463 = vmatpush2.bf16.msra.mxu0 0
        %1464 = vmatprep.subr.bf16.mxu0 0
        %1465 = vmatpush2.bf16.msra.mxu0 0
        %1466 = vmatprep.subr.bf16.mxu0 0
        %1467 = vmatpush2.bf16.msra.mxu0 0
        %1468 = vmatprep.subr.bf16.mxu0 0
        %1469 = vmatpush2.bf16.msra.mxu0 0
        %1470 = vmatprep.subr.bf16.mxu0 0
        %1471 = vmatpush2.bf16.msra.mxu0 0
        %1472 = vmatprep.subr.bf16.mxu0 0
        %1473 = vmatpush2.bf16.msra.mxu0 0
        %1474 = vmatprep.subr.bf16.mxu0 0
        %1475 = vmatpush2.bf16.msra.mxu0 0
        %1476 = vmatprep.subr.bf16.mxu0 0
        %1477 = vmatpush2.bf16.msra.mxu0 0
        %1478 = vmatprep.mubr.bf16.mxu0 0
        %1479 = vmatmul.mubr.bf16.gmra.mxu0 %v1444
        %v1480 = vpop.f32.mrf.mxu0
        %v1481 = vadd.f32 0.0, %v1480
        %v1482 = vpop.f32.mrf.mxu0
        %v1483 = vpop.f32.mrf.mxu0
        %v1484 = vadd.f32 0.0, %v1483
        %v1485 = vpop.f32.mrf.mxu0
        %1486 = vdwg.mxu0
        %v1487 = vpack.c.bf16 %v1352, %v1349
        %v1488 = vpack.c.bf16 %v1396, %v1393
        %v1489 = vpack.c.bf16 %v1440, %v1437
        %v1490 = vpack.c.bf16 %v1484, %v1481
        %v1491 = vld [vmem:[%s520] sm:$0xf]
        %v1493 = vsel %vm1029, %v1487, 0
        %v1496 = vsel %vm1029, %v1488, 0
        %v1499 = vsel %vm1029, %v1489, 0
        %v1502 = vsel %vm1029, %v1490, 0
        %vm1504 = vcmask 1043456
        %v1506 = vsel %vm1504, %v1491, 0
        %1508 = vmatprep.subr.bf16.mxu0 0
        %1509 = vmatpush1.bf16.msra.mxu0 0
        %1510 = vmatprep.subr.bf16.mxu0 0
        %1511 = vmatpush1.bf16.msra.mxu0 0
        %1512 = vmatprep.subr.bf16.mxu0 0
        %1513 = vmatpush1.bf16.msra.mxu0 0
        %1514 = vmatprep.subr.bf16.mxu0 0
        %1515 = vmatpush1.bf16.msra.mxu0 0
        %1516 = vmatprep.subr.bf16.mxu0 0
        %1517 = vmatpush1.bf16.msra.mxu0 0
        %1518 = vmatprep.subr.bf16.mxu0 0
        %1519 = vmatpush1.bf16.msra.mxu0 0
        %1520 = vmatprep.subr.bf16.mxu0 0
        %1521 = vmatpush1.bf16.msra.mxu0 0
        %1522 = vmatprep.subr.bf16.mxu0 0
        %1523 = vmatpush1.bf16.msra.mxu0 %v1506
        %1524 = vmatprep.subr.bf16.mxu0 0
        %1525 = vmatpush2.bf16.msra.mxu0 0
        %1526 = vmatprep.subr.bf16.mxu0 0
        %1527 = vmatpush2.bf16.msra.mxu0 0
        %1528 = vmatprep.subr.bf16.mxu0 0
        %1529 = vmatpush2.bf16.msra.mxu0 0
        %1530 = vmatprep.subr.bf16.mxu0 0
        %1531 = vmatpush2.bf16.msra.mxu0 0
        %1532 = vmatprep.subr.bf16.mxu0 0
        %1533 = vmatpush2.bf16.msra.mxu0 0
        %1534 = vmatprep.subr.bf16.mxu0 0
        %1535 = vmatpush2.bf16.msra.mxu0 0
        %1536 = vmatprep.subr.bf16.mxu0 0
        %1537 = vmatpush2.bf16.msra.mxu0 0
        %1538 = vmatprep.subr.bf16.mxu0 0
        %1539 = vmatpush2.bf16.msra.mxu0 0
        %1540 = vmatprep.mubr.bf16.mxu0 0
        %1541 = vmatmul.mubr.bf16.gmra.mxu0 %v1493
        %v1542 = vpop.f32.mrf.mxu0
        %v1543 = vadd.f32 0.0, %v1542
        %v1544 = vpop.f32.mrf.mxu0
        %v1545 = vpop.f32.mrf.mxu0
        %v1546 = vadd.f32 0.0, %v1545
        %v1547 = vpop.f32.mrf.mxu0
        %1548 = vmatprep.mubr.bf16.mxu0 0
        %1549 = vmatmul.mubr.bf16.gmra.mxu0 %v1496
        %v1550 = vpop.f32.mrf.mxu0
        %v1551 = vadd.f32 0.0, %v1550
        %v1552 = vpop.f32.mrf.mxu0
        %v1553 = vpop.f32.mrf.mxu0
        %v1554 = vadd.f32 0.0, %v1553
        %v1555 = vpop.f32.mrf.mxu0
        %1556 = vmatprep.mubr.bf16.mxu0 0
        %1557 = vmatmul.mubr.bf16.gmra.mxu0 %v1499
        %v1558 = vpop.f32.mrf.mxu0
        %v1559 = vadd.f32 0.0, %v1558
        %v1560 = vpop.f32.mrf.mxu0
        %v1561 = vpop.f32.mrf.mxu0
        %v1562 = vadd.f32 0.0, %v1561
        %v1563 = vpop.f32.mrf.mxu0
        %1564 = vmatprep.mubr.bf16.mxu0 0
        %1565 = vmatmul.mubr.bf16.gmra.mxu0 %v1502
        %v1566 = vpop.f32.mrf.mxu0
        %v1567 = vadd.f32 0.0, %v1566
        %v1568 = vpop.f32.mrf.mxu0
        %v1569 = vpop.f32.mrf.mxu0
        %v1570 = vadd.f32 0.0, %v1569
        %v1571 = vpop.f32.mrf.mxu0
        %1572 = vdwg.mxu0
        // Predicated region
        $region69: #{tpu_custom_call.1} parent=63 // pred_check
          %p1573 = pneg %p523
        $region70: #{tpu_custom_call.1} parent=63 // pred_check_branch
          %1575 = sbr.rel (%p1573) target = $region72
        $region71: #{tpu_custom_call.1} parent=63 // pred_region
          %1576 = vst.msk [vmem:[#allocation3] sm:$0xff] %vm763, %v1543
          %1577 = vst.msk [vmem:[#allocation3 + $0x8] sm:$0xff] %vm763, %v1546
          %1578 = vst.msk [vmem:[#allocation3 + $0x10] sm:$0xff] %vm763, %v1551
          %1579 = vst.msk [vmem:[#allocation3 + $0x18] sm:$0xff] %vm763, %v1554
          %1580 = vst.msk [vmem:[#allocation3 + $0x20] sm:$0xff] %vm763, %v1559
          %1581 = vst.msk [vmem:[#allocation3 + $0x28] sm:$0xff] %vm763, %v1562
          %1582 = vst.msk [vmem:[#allocation3 + $0x30] sm:$0xff] %vm763, %v1567
          %1583 = vst.msk [vmem:[#allocation3 + $0x38] sm:$0xff] %vm763, %v1570
        $region72: #{tpu_custom_call.1} parent=63 // pred_fallthru
          _
        %p1584 = scmp.gt.s32.totalorder %s30, 0
        // Predicated region
        $region73: #{tpu_custom_call.1} parent=63 // pred_check
          %p1585 = pneg %p1584
        $region74: #{tpu_custom_call.1} parent=63 // pred_check_branch
          %1587 = sbr.rel (%p1585) target = $region76
        $region75: #{tpu_custom_call.1} parent=63 // pred_region
          %v1588 = vld [vmem:[#allocation3] sm:$0xff]
          %v1589 = vld [vmem:[#allocation3 + $0x8] sm:$0xff]
          %v1590 = vld [vmem:[#allocation3 + $0x10] sm:$0xff]
          %v1591 = vld [vmem:[#allocation3 + $0x18] sm:$0xff]
          %v1592 = vld [vmem:[#allocation3 + $0x20] sm:$0xff]
          %v1593 = vld [vmem:[#allocation3 + $0x28] sm:$0xff]
          %v1594 = vld [vmem:[#allocation3 + $0x30] sm:$0xff]
          %v1595 = vld [vmem:[#allocation3 + $0x38] sm:$0xff]
          %v1596 = vadd.f32 %v1588, %v1543
          %v1597 = vadd.f32 %v1589, %v1546
          %v1598 = vadd.f32 %v1590, %v1551
          %v1599 = vadd.f32 %v1591, %v1554
          %v1600 = vadd.f32 %v1592, %v1559
          %v1601 = vadd.f32 %v1593, %v1562
          %v1602 = vadd.f32 %v1594, %v1567
          %v1603 = vadd.f32 %v1595, %v1570
          %1604 = vst.msk [vmem:[#allocation3] sm:$0xff] %vm763, %v1596
          %1605 = vst.msk [vmem:[#allocation3 + $0x8] sm:$0xff] %vm763, %v1597
          %1606 = vst.msk [vmem:[#allocation3 + $0x10] sm:$0xff] %vm763, %v1598
          %1607 = vst.msk [vmem:[#allocation3 + $0x18] sm:$0xff] %vm763, %v1599
          %1608 = vst.msk [vmem:[#allocation3 + $0x20] sm:$0xff] %vm763, %v1600
          %1609 = vst.msk [vmem:[#allocation3 + $0x28] sm:$0xff] %vm763, %v1601
          %1610 = vst.msk [vmem:[#allocation3 + $0x30] sm:$0xff] %vm763, %v1602
          %1611 = vst.msk [vmem:[#allocation3 + $0x38] sm:$0xff] %vm763, %v1603
        $region76: #{tpu_custom_call.1} parent=63 // pred_fallthru
          _
        %p1612 = scmp.eq.s32.totalorder %s30, 3
        // Predicated region
        $region77: #{tpu_custom_call.1} parent=63 // pred_check
          %p1613 = pneg %p1612
        $region78: #{tpu_custom_call.1} parent=63 // pred_check_branch
          %1615 = sbr.rel (%p1613) target = $region80
        $region79: #{tpu_custom_call.1} parent=63 // pred_region
          %v1616 = vld [vmem:[#allocation3] sm:$0xff]
          %v1617 = vld [vmem:[#allocation3 + $0x8] sm:$0xff]
          %v1618 = vld [vmem:[#allocation3 + $0x10] sm:$0xff]
          %v1619 = vld [vmem:[#allocation3 + $0x18] sm:$0xff]
          %v1620 = vld [vmem:[#allocation3 + $0x20] sm:$0xff]
          %v1621 = vld [vmem:[#allocation3 + $0x28] sm:$0xff]
          %v1622 = vld [vmem:[#allocation3 + $0x30] sm:$0xff]
          %v1623 = vld [vmem:[#allocation3 + $0x38] sm:$0xff]
          %v1624 = vld [vmem:[%s10] sm:$0x1]
          %v1626 = vlaneseq
          %v1627 = vshrl.u32 %v1626, 7
          %v1628 = vsub.s32 0, %v1627
          %v1629 = vrot.slane %v1624, %v1628
          %v1631 = vadd.f32 %v1616, %v1629
          %v1632 = vadd.f32 %v1617, %v1629
          %v1633 = vadd.f32 %v1618, %v1629
          %v1634 = vadd.f32 %v1619, %v1629
          %v1635 = vadd.f32 %v1620, %v1629
          %v1636 = vadd.f32 %v1621, %v1629
          %v1637 = vadd.f32 %v1622, %v1629
          %v1638 = vadd.f32 %v1623, %v1629
          %1639 = vst.msk [vmem:[%s485] sm:$0xff] %vm763, %v1631
          %1640 = vst.msk [vmem:[%s485 + $0x8] sm:$0xff] %vm763, %v1632
          %1641 = vst.msk [vmem:[%s485 + $0x10] sm:$0xff] %vm763, %v1633
          %1642 = vst.msk [vmem:[%s485 + $0x18] sm:$0xff] %vm763, %v1634
          %1643 = vst.msk [vmem:[%s485 + $0x20] sm:$0xff] %vm763, %v1635
          %1644 = vst.msk [vmem:[%s485 + $0x28] sm:$0xff] %vm763, %v1636
          %1645 = vst.msk [vmem:[%s485 + $0x30] sm:$0xff] %vm763, %v1637
          %1646 = vst.msk [vmem:[%s485 + $0x38] sm:$0xff] %vm763, %v1638
        $region80: #{tpu_custom_call.1} parent=63 // pred_fallthru
          _
        %s1647 = sand.u32 %s316, 1
        %s1648 = scalar_lea.sflag [#allocation5], %s1647
        %s1649 = sand.u32 %s316, 1
        %s1650 = smul.addr %s1649, 64
        %s1651 = scalar_lea.vmem [#allocation4], %s1650
        // Predicated region
        $region81: #{tpu_custom_call.1} parent=63 // pred_check
          %p1652 = pneg %p326
        $region82: #{tpu_custom_call.1} parent=63 // pred_check_branch
          %1654 = sbr.rel (%p1652) target = $region84
        $region83: #{tpu_custom_call.1} parent=63 // pred_region
          %s1655 = smul.u32 4, %s29
          %s1657 = ssub.s32 1024, 1024
          %1658 = vsyncadd %s1648, %s1657
          %s1659 = smul.addr %s1655, 2
          %s1660 = smul.addr %s1659, 128
          %s1661 = scalar_lea.hbm %s11, %s1660
          %s1662 = sshll.u32 %s1651, 4
          %s1663 = int_to_ptr.vmem [resolvable:$true] %s1662
          %1668 = dma.vmem_to_hbm [thread:$0]  %s1663, 1024, %s1661, %s1648, 128, 128, 8
        $region84: #{tpu_custom_call.1} parent=63 // pred_fallthru
          _
      $region64: #{tpu_custom_call.1} parent=5 // pred_fallthru
        _
      %p1669 = scmp.le.s32.totalorder 2, %s20
      // Predicated region
      $region85: #{tpu_custom_call.1} parent=5 // pred_check
        %p1670 = pneg %p1669
      $region86: #{tpu_custom_call.1} parent=5 // pred_check_branch
        %1672 = sbr.rel (%p1670) target = $region88
      $region87: #{tpu_custom_call.1} parent=5 // pred_region
        %s1673 = ssub.s32 %s20, 2
        // Predicated region
        $region89: #{tpu_custom_call.1} parent=87 // pred_check
          %p1674 = pneg %p332
        $region90: #{tpu_custom_call.1} parent=87 // pred_check_branch
          %1676 = sbr.rel (%p1674) target = $region92
        $region91: #{tpu_custom_call.1} parent=87 // pred_region
          %s1677 = sand.u32 %s317, 1
          %s1678 = scalar_lea.sflag [#allocation5], %s1677
          %s1679 = sand.u32 %s317, 1
          %s1680 = smul.addr %s1679, 64
          %s1681 = scalar_lea.vmem [#allocation4], %s1680
          %1682 = dma.done %s1678, 1024
        $region92: #{tpu_custom_call.1} parent=87 // pred_fallthru
          _
      $region88: #{tpu_custom_call.1} parent=5 // pred_fallthru
        _
    $region6: #{tpu_custom_call.1} parent=1 // loop_footer
      %s24 = sadd.s32 1, %s20
    $region7: #{tpu_custom_call.1} parent=1 // loop_footer_branch
      %19 = sbr.rel target = $region3
    $region8: #{tpu_custom_call.1} parent=1 // loop_exit
      _
    %1683 = vsyncpa [#allocation5], 1
    %s1684 = scalar_lea.sflag [#allocation5], 1
    %1685 = vsyncpa %s1684, 1

</llo_original>
